<compile_context>
chip_gen: v6e
topology: v6e:2x2x1
jax: 0.10.0
libtpu: 0.0.40
codegen_flags: <defaults>
</compile_context>

<pallas_src>
import functools

import jax
import jax.numpy as jnp
from jax.experimental import pallas as pl
from jax.experimental.pallas import tpu as pltpu


# ----------------------------------------------------------------------------
# Fused Pallas kernel: stacked LSTM layers + final Linear, single launch
# ----------------------------------------------------------------------------
def _make_fused_rnn_kernel(T, B, H, num_layers):
    n_in = 1 + 3 * num_layers + 2     # x, (wih, whh, b) per layer, w_lin, b_lin

    def kernel(*refs):
        x_ref = refs[0]
        layer_refs = refs[1:1 + 3 * num_layers]
        w_lin_ref = refs[1 + 3 * num_layers]
        b_lin_ref = refs[2 + 3 * num_layers]
        out_ref = refs[n_in]
        hseq_scr = refs[n_in + 1]                     # (T*B, H) f32 VMEM scratch

        seq = x_ref[...].astype(jnp.float32)          # (T*B, F_in) time-major
        h = None

        for layer in range(num_layers):
            wih = layer_refs[3 * layer][...]          # (F_in, 4H)
            whh = layer_refs[3 * layer + 1][...]      # (H, 4H)
            b = layer_refs[3 * layer + 2][...]        # (1, 4H)

            # Hoisted input projection: one matmul covers all T timesteps.
            gates_x = jnp.dot(seq, wih,
                              preferred_element_type=jnp.float32) + b  # (T*B, 4H)

            h = jnp.zeros((B, H), jnp.float32)
            c = jnp.zeros((B, H), jnp.float32)
            last_layer = (layer == num_layers - 1)

            for t in range(T):                        # statically unrolled
                gates = gates_x[t * B:(t + 1) * B, :] + jnp.dot(
                    h, whh, preferred_element_type=jnp.float32)        # (B, 4H)
                # Two full 128-lane EUP passes instead of four 32-lane ones.
                sig = jax.nn.sigmoid(gates)
                tng = jnp.tanh(gates)
                i_g = sig[:, 0 * H:1 * H]
                f_g = sig[:, 1 * H:2 * H]
                g_g = tng[:, 2 * H:3 * H]
                o_g = sig[:, 3 * H:4 * H]
                c = f_g * c + i_g * g_g
                h = o_g * jnp.tanh(c)
                if not last_layer:
                    hseq_scr[t * B:(t + 1) * B, :] = h

            if not last_layer:
                # TODO(synk): training-mode inter-layer dropout not implemented
                # (dropout=0.0 / inference semantics -> identity).
                seq = hseq_scr[...]                   # (T*B, H) for next layer

        # Final classifier on the last timestep of the last layer
        # (== Linear(out[:, -1, :]) in the PyTorch module).
        out_ref[...] = (jnp.dot(h, w_lin_ref[...],
                                preferred_element_type=jnp.float32)
                        + b_lin_ref[...]).astype(out_ref.dtype)

    return kernel


# ----------------------------------------------------------------------------
# Wrapper
# ----------------------------------------------------------------------------
def _rnn_forward_impl(x, params):
    """x: (B, T, input_size), batch_first like the PyTorch module."""
    B, T, F = x.shape
    num_layers = len(params["layers"])
    H = params["layers"][0]["whh_t"].shape[0]
    C = params["lin_w_t"].shape[1]

    # Time-major, flattened, so each layer's input projection is one matmul.
    x_tb = jnp.transpose(x, (1, 0, 2)).reshape(T * B, F).astype(jnp.float32)

    args = [x_tb]
    for lp in params["layers"]:
        args.extend([lp["wih_t"], lp["whh_t"], lp["b"]])
    args.extend([params["lin_w_t"], params["lin_b"]])

    kernel = _make_fused_rnn_kernel(T, B, H, num_layers)
    return pl.pallas_call(
        kernel,
        out_shape=jax.ShapeDtypeStruct((B, C), jnp.float32),
        scratch_shapes=[pltpu.VMEM((T * B, H), jnp.float32)],
    )(*args)


rnn_forward = jax.jit(_rnn_forward_impl)


# ----------------------------------------------------------------------------
# Parameter init mimicking PyTorch's uniform(-k, k)
# ----------------------------------------------------------------------------
def init_rnn_params(key, input_size, hidden_size, num_layers, num_classes):
    params = {"layers": []}
    k = 1.0 / jnp.sqrt(jnp.float32(hidden_size))
    for layer in range(num_layers):
        in_f = input_size if layer == 0 else hidden_size
        key, k1, k2, k3, k4 = jax.random.split(key, 5)
        w_ih = jax.random.uniform(k1, (4 * hidden_size, in_f), jnp.float32, -k, k)
        w_hh = jax.random.uniform(k2, (4 * hidden_size, hidden_size), jnp.float32, -k, k)
        b_ih = jax.random.uniform(k3, (4 * hidden_size,), jnp.float32, -k, k)
        b_hh = jax.random.uniform(k4, (4 * hidden_size,), jnp.float32, -k, k)
        params["layers"].append({
            "wih_t": w_ih.T,                       # (in_f, 4H)
            "whh_t": w_hh.T,                       # (H, 4H)
            "b": (b_ih + b_hh)[None, :],           # (1, 4H)
        })
    key, k5, k6 = jax.random.split(key, 3)
    kl = 1.0 / jnp.sqrt(jnp.float32(hidden_size))
    w_lin = jax.random.uniform(k5, (num_classes, hidden_size), jnp.float32, -kl, kl)
    b_lin = jax.random.uniform(k6, (num_classes,), jnp.float32, -kl, kl)
    params["lin_w_t"] = w_lin.T                    # (H, C)
    params["lin_b"] = b_lin[None, :]               # (1, C)
    return params


# ----------------------------------------------------------------------------
# Pure-JAX reference (correctness check)
# ----------------------------------------------------------------------------
def rnn_forward_ref(x, params):
    B = x.shape[0]
    seq = jnp.transpose(x, (1, 0, 2)).astype(jnp.float32)
    for layer_p in params["layers"]:
        H = layer_p["whh_t"].shape[0]
        h = jnp.zeros((B, H), jnp.float32)
        c = jnp.zeros((B, H), jnp.float32)
        outs = []
        for t in range(seq.shape[0]):
            gates = seq[t] @ layer_p["wih_t"] + h @ layer_p["whh_t"] + layer_p["b"]
            i_g = jax.nn.sigmoid(gates[:, 0 * H:1 * H])
            f_g = jax.nn.sigmoid(gates[:, 1 * H:2 * H])
            g_g = jnp.tanh(gates[:, 2 * H:3 * H])
            o_g = jax.nn.sigmoid(gates[:, 3 * H:4 * H])
            c = f_g * c + i_g * g_g
            h = o_g * jnp.tanh(c)
            outs.append(h)
        seq = jnp.stack(outs, axis=0)
    return seq[-1] @ params["lin_w_t"] + params["lin_b"]


# ----------------------------------------------------------------------------
if __name__ == "__main__":
    # opts: input_size=16, hidden_size=32, num_layers=2, num_classes=10,
    #       dropout=0.0, batch_size=2, seq_len=8
    INPUT_SIZE, HIDDEN_SIZE, NUM_LAYERS, NUM_CLASSES = 16, 32, 2, 10
    BATCH, SEQ = 2, 8

    key = jax.random.PRNGKey(0)
    key, xk = jax.random.split(key)
    x = jax.random.normal(xk, (BATCH, SEQ, INPUT_SIZE), jnp.float32)

    params = init_rnn_params(key, INPUT_SIZE, HIDDEN_SIZE, NUM_LAYERS, NUM_CLASSES)

    out = rnn_forward(x, params)
    out = jax.block_until_ready(out)

    ref = rnn_forward_ref(x, params)
    assert out.shape == (BATCH, NUM_CLASSES), out.shape
    assert jnp.allclose(out, ref, atol=1e-5, rtol=1e-5), "mismatch vs reference"

    print("KERNEL_OK")
</pallas_src>

<mosaic_0001>
module attributes {stable_mosaic.version = 11 : i64} {
  func.func @kernel(%arg0: memref<16x16xf32, #tpu.memory_space<vmem>>, %arg1: memref<16x128xf32, #tpu.memory_space<vmem>>, %arg2: memref<32x128xf32, #tpu.memory_space<vmem>>, %arg3: memref<1x128xf32, #tpu.memory_space<vmem>>, %arg4: memref<32x128xf32, #tpu.memory_space<vmem>>, %arg5: memref<32x128xf32, #tpu.memory_space<vmem>>, %arg6: memref<1x128xf32, #tpu.memory_space<vmem>>, %arg7: memref<32x10xf32, #tpu.memory_space<vmem>>, %arg8: memref<1x10xf32, #tpu.memory_space<vmem>>, %arg9: memref<2x10xf32, #tpu.memory_space<vmem>>, %arg10: memref<16x32xf32, #tpu.memory_space<vmem>>) attributes {dimension_semantics = [], scalar_prefetch = 0 : i64, scratch_operands = 1 : i64, tpu.core_type = #tpu.core_type<tc>} {
    %c0 = arith.constant 0 : index
    %c0_0 = arith.constant 0 : index
    %0 = vector.load %arg0[%c0, %c0_0] : memref<16x16xf32, #tpu.memory_space<vmem>>, vector<16x16xf32>
    %c0_1 = arith.constant 0 : index
    %c0_2 = arith.constant 0 : index
    %1 = vector.load %arg1[%c0_1, %c0_2] : memref<16x128xf32, #tpu.memory_space<vmem>>, vector<16x128xf32>
    %c0_3 = arith.constant 0 : index
    %c0_4 = arith.constant 0 : index
    %2 = vector.load %arg2[%c0_3, %c0_4] : memref<32x128xf32, #tpu.memory_space<vmem>>, vector<32x128xf32>
    %c0_5 = arith.constant 0 : index
    %c0_6 = arith.constant 0 : index
    %3 = vector.load %arg3[%c0_5, %c0_6] : memref<1x128xf32, #tpu.memory_space<vmem>>, vector<1x128xf32>
    %cst = arith.constant dense<0.000000e+00> : vector<16x128xf32>
    %4 = tpu.matmul %0, %1, %cst {dimension_numbers = #tpu.dot_dimension_numbers<[1], [0], [0], [1], [0, 0, 1, 1], [], []>} : vector<16x16xf32>, vector<16x128xf32>, vector<16x128xf32> -> vector<16x128xf32>
    %5 = vector.broadcast %3 : vector<1x128xf32> to vector<16x128xf32>
    %6 = arith.addf %4, %5 : vector<16x128xf32>
    %cst_7 = arith.constant 0.000000e+00 : f32
    %7 = vector.broadcast %cst_7 : f32 to vector<2x32xf32>
    %cst_8 = arith.constant 0.000000e+00 : f32
    %8 = vector.broadcast %cst_8 : f32 to vector<2x32xf32>
    %9 = vector.extract_strided_slice %6 {offsets = [0, 0], sizes = [2, 128], strides = [1, 1]} : vector<16x128xf32> to vector<2x128xf32>
    %cst_9 = arith.constant dense<0.000000e+00> : vector<2x128xf32>
    %10 = tpu.matmul %7, %2, %cst_9 {dimension_numbers = #tpu.dot_dimension_numbers<[1], [0], [0], [1], [0, 0, 1, 1], [], []>} : vector<2x32xf32>, vector<32x128xf32>, vector<2x128xf32> -> vector<2x128xf32>
    %11 = arith.addf %9, %10 : vector<2x128xf32>
    %12 = arith.negf %11 : vector<2x128xf32>
    %13 = math.exp %12 : vector<2x128xf32>
    %cst_10 = arith.constant 1.000000e+00 : f32
    %14 = vector.broadcast %cst_10 : f32 to vector<2x128xf32>
    %15 = arith.addf %14, %13 : vector<2x128xf32>
    %16 = arith.divf %14, %15 : vector<2x128xf32>
    %17 = math.tanh %11 : vector<2x128xf32>
    %18 = vector.extract_strided_slice %16 {offsets = [0, 0], sizes = [2, 32], strides = [1, 1]} : vector<2x128xf32> to vector<2x32xf32>
    %19 = vector.extract_strided_slice %16 {offsets = [0, 32], sizes = [2, 32], strides = [1, 1]} : vector<2x128xf32> to vector<2x32xf32>
    %20 = vector.extract_strided_slice %17 {offsets = [0, 64], sizes = [2, 32], strides = [1, 1]} : vector<2x128xf32> to vector<2x32xf32>
    %21 = vector.extract_strided_slice %16 {offsets = [0, 96], sizes = [2, 32], strides = [1, 1]} : vector<2x128xf32> to vector<2x32xf32>
    %22 = arith.mulf %19, %8 : vector<2x32xf32>
    %23 = arith.mulf %18, %20 : vector<2x32xf32>
    %24 = arith.addf %22, %23 : vector<2x32xf32>
    %25 = math.tanh %24 : vector<2x32xf32>
    %26 = arith.mulf %21, %25 : vector<2x32xf32>
    %c0_11 = arith.constant 0 : index
    %c0_12 = arith.constant 0 : index
    %27 = vector.load %arg10[%c0_11, %c0_12] : memref<16x32xf32, #tpu.memory_space<vmem>>, vector<2x32xf32>
    tpu.vector_store %arg10[%c0_11, %c0_12], %26 {strides = array<i32>} : memref<16x32xf32, #tpu.memory_space<vmem>>, vector<2x32xf32>,
    %28 = vector.extract_strided_slice %6 {offsets = [2, 0], sizes = [2, 128], strides = [1, 1]} : vector<16x128xf32> to vector<2x128xf32>
    %cst_13 = arith.constant dense<0.000000e+00> : vector<2x128xf32>
    %29 = tpu.matmul %26, %2, %cst_13 {dimension_numbers = #tpu.dot_dimension_numbers<[1], [0], [0], [1], [0, 0, 1, 1], [], []>} : vector<2x32xf32>, vector<32x128xf32>, vector<2x128xf32> -> vector<2x128xf32>
    %30 = arith.addf %28, %29 : vector<2x128xf32>
    %31 = arith.negf %30 : vector<2x128xf32>
    %32 = math.exp %31 : vector<2x128xf32>
    %cst_14 = arith.constant 1.000000e+00 : f32
    %33 = vector.broadcast %cst_14 : f32 to vector<2x128xf32>
    %34 = arith.addf %33, %32 : vector<2x128xf32>
    %35 = arith.divf %33, %34 : vector<2x128xf32>
    %36 = math.tanh %30 : vector<2x128xf32>
    %37 = vector.extract_strided_slice %35 {offsets = [0, 0], sizes = [2, 32], strides = [1, 1]} : vector<2x128xf32> to vector<2x32xf32>
    %38 = vector.extract_strided_slice %35 {offsets = [0, 32], sizes = [2, 32], strides = [1, 1]} : vector<2x128xf32> to vector<2x32xf32>
    %39 = vector.extract_strided_slice %36 {offsets = [0, 64], sizes = [2, 32], strides = [1, 1]} : vector<2x128xf32> to vector<2x32xf32>
    %40 = vector.extract_strided_slice %35 {offsets = [0, 96], sizes = [2, 32], strides = [1, 1]} : vector<2x128xf32> to vector<2x32xf32>
    %41 = arith.mulf %38, %24 : vector<2x32xf32>
    %42 = arith.mulf %37, %39 : vector<2x32xf32>
    %43 = arith.addf %41, %42 : vector<2x32xf32>
    %44 = math.tanh %43 : vector<2x32xf32>
    %45 = arith.mulf %40, %44 : vector<2x32xf32>
    %c2 = arith.constant 2 : index
    %c0_15 = arith.constant 0 : index
    %46 = vector.load %arg10[%c2, %c0_15] : memref<16x32xf32, #tpu.memory_space<vmem>>, vector<2x32xf32>
    tpu.vector_store %arg10[%c2, %c0_15], %45 {strides = array<i32>} : memref<16x32xf32, #tpu.memory_space<vmem>>, vector<2x32xf32>,
    %47 = vector.extract_strided_slice %6 {offsets = [4, 0], sizes = [2, 128], strides = [1, 1]} : vector<16x128xf32> to vector<2x128xf32>
    %cst_16 = arith.constant dense<0.000000e+00> : vector<2x128xf32>
    %48 = tpu.matmul %45, %2, %cst_16 {dimension_numbers = #tpu.dot_dimension_numbers<[1], [0], [0], [1], [0, 0, 1, 1], [], []>} : vector<2x32xf32>, vector<32x128xf32>, vector<2x128xf32> -> vector<2x128xf32>
    %49 = arith.addf %47, %48 : vector<2x128xf32>
    %50 = arith.negf %49 : vector<2x128xf32>
    %51 = math.exp %50 : vector<2x128xf32>
    %cst_17 = arith.constant 1.000000e+00 : f32
    %52 = vector.broadcast %cst_17 : f32 to vector<2x128xf32>
    %53 = arith.addf %52, %51 : vector<2x128xf32>
    %54 = arith.divf %52, %53 : vector<2x128xf32>
    %55 = math.tanh %49 : vector<2x128xf32>
    %56 = vector.extract_strided_slice %54 {offsets = [0, 0], sizes = [2, 32], strides = [1, 1]} : vector<2x128xf32> to vector<2x32xf32>
    %57 = vector.extract_strided_slice %54 {offsets = [0, 32], sizes = [2, 32], strides = [1, 1]} : vector<2x128xf32> to vector<2x32xf32>
    %58 = vector.extract_strided_slice %55 {offsets = [0, 64], sizes = [2, 32], strides = [1, 1]} : vector<2x128xf32> to vector<2x32xf32>
    %59 = vector.extract_strided_slice %54 {offsets = [0, 96], sizes = [2, 32], strides = [1, 1]} : vector<2x128xf32> to vector<2x32xf32>
    %60 = arith.mulf %57, %43 : vector<2x32xf32>
    %61 = arith.mulf %56, %58 : vector<2x32xf32>
    %62 = arith.addf %60, %61 : vector<2x32xf32>
    %63 = math.tanh %62 : vector<2x32xf32>
    %64 = arith.mulf %59, %63 : vector<2x32xf32>
    %c4 = arith.constant 4 : index
    %c0_18 = arith.constant 0 : index
    %65 = vector.load %arg10[%c4, %c0_18] : memref<16x32xf32, #tpu.memory_space<vmem>>, vector<2x32xf32>
    tpu.vector_store %arg10[%c4, %c0_18], %64 {strides = array<i32>} : memref<16x32xf32, #tpu.memory_space<vmem>>, vector<2x32xf32>,
    %66 = vector.extract_strided_slice %6 {offsets = [6, 0], sizes = [2, 128], strides = [1, 1]} : vector<16x128xf32> to vector<2x128xf32>
    %cst_19 = arith.constant dense<0.000000e+00> : vector<2x128xf32>
    %67 = tpu.matmul %64, %2, %cst_19 {dimension_numbers = #tpu.dot_dimension_numbers<[1], [0], [0], [1], [0, 0, 1, 1], [], []>} : vector<2x32xf32>, vector<32x128xf32>, vector<2x128xf32> -> vector<2x128xf32>
    %68 = arith.addf %66, %67 : vector<2x128xf32>
    %69 = arith.negf %68 : vector<2x128xf32>
    %70 = math.exp %69 : vector<2x128xf32>
    %cst_20 = arith.constant 1.000000e+00 : f32
    %71 = vector.broadcast %cst_20 : f32 to vector<2x128xf32>
    %72 = arith.addf %71, %70 : vector<2x128xf32>
    %73 = arith.divf %71, %72 : vector<2x128xf32>
    %74 = math.tanh %68 : vector<2x128xf32>
    %75 = vector.extract_strided_slice %73 {offsets = [0, 0], sizes = [2, 32], strides = [1, 1]} : vector<2x128xf32> to vector<2x32xf32>
    %76 = vector.extract_strided_slice %73 {offsets = [0, 32], sizes = [2, 32], strides = [1, 1]} : vector<2x128xf32> to vector<2x32xf32>
    %77 = vector.extract_strided_slice %74 {offsets = [0, 64], sizes = [2, 32], strides = [1, 1]} : vector<2x128xf32> to vector<2x32xf32>
    %78 = vector.extract_strided_slice %73 {offsets = [0, 96], sizes = [2, 32], strides = [1, 1]} : vector<2x128xf32> to vector<2x32xf32>
    %79 = arith.mulf %76, %62 : vector<2x32xf32>
    %80 = arith.mulf %75, %77 : vector<2x32xf32>
    %81 = arith.addf %79, %80 : vector<2x32xf32>
    %82 = math.tanh %81 : vector<2x32xf32>
    %83 = arith.mulf %78, %82 : vector<2x32xf32>
    %c6 = arith.constant 6 : index
    %c0_21 = arith.constant 0 : index
    %84 = vector.load %arg10[%c6, %c0_21] : memref<16x32xf32, #tpu.memory_space<vmem>>, vector<2x32xf32>
    tpu.vector_store %arg10[%c6, %c0_21], %83 {strides = array<i32>} : memref<16x32xf32, #tpu.memory_space<vmem>>, vector<2x32xf32>,
    %85 = vector.extract_strided_slice %6 {offsets = [8, 0], sizes = [2, 128], strides = [1, 1]} : vector<16x128xf32> to vector<2x128xf32>
    %cst_22 = arith.constant dense<0.000000e+00> : vector<2x128xf32>
    %86 = tpu.matmul %83, %2, %cst_22 {dimension_numbers = #tpu.dot_dimension_numbers<[1], [0], [0], [1], [0, 0, 1, 1], [], []>} : vector<2x32xf32>, vector<32x128xf32>, vector<2x128xf32> -> vector<2x128xf32>
    %87 = arith.addf %85, %86 : vector<2x128xf32>
    %88 = arith.negf %87 : vector<2x128xf32>
    %89 = math.exp %88 : vector<2x128xf32>
    %cst_23 = arith.constant 1.000000e+00 : f32
    %90 = vector.broadcast %cst_23 : f32 to vector<2x128xf32>
    %91 = arith.addf %90, %89 : vector<2x128xf32>
    %92 = arith.divf %90, %91 : vector<2x128xf32>
    %93 = math.tanh %87 : vector<2x128xf32>
    %94 = vector.extract_strided_slice %92 {offsets = [0, 0], sizes = [2, 32], strides = [1, 1]} : vector<2x128xf32> to vector<2x32xf32>
    %95 = vector.extract_strided_slice %92 {offsets = [0, 32], sizes = [2, 32], strides = [1, 1]} : vector<2x128xf32> to vector<2x32xf32>
    %96 = vector.extract_strided_slice %93 {offsets = [0, 64], sizes = [2, 32], strides = [1, 1]} : vector<2x128xf32> to vector<2x32xf32>
    %97 = vector.extract_strided_slice %92 {offsets = [0, 96], sizes = [2, 32], strides = [1, 1]} : vector<2x128xf32> to vector<2x32xf32>
    %98 = arith.mulf %95, %81 : vector<2x32xf32>
    %99 = arith.mulf %94, %96 : vector<2x32xf32>
    %100 = arith.addf %98, %99 : vector<2x32xf32>
    %101 = math.tanh %100 : vector<2x32xf32>
    %102 = arith.mulf %97, %101 : vector<2x32xf32>
    %c8 = arith.constant 8 : index
    %c0_24 = arith.constant 0 : index
    %103 = vector.load %arg10[%c8, %c0_24] : memref<16x32xf32, #tpu.memory_space<vmem>>, vector<2x32xf32>
    tpu.vector_store %arg10[%c8, %c0_24], %102 {strides = array<i32>} : memref<16x32xf32, #tpu.memory_space<vmem>>, vector<2x32xf32>,
    %104 = vector.extract_strided_slice %6 {offsets = [10, 0], sizes = [2, 128], strides = [1, 1]} : vector<16x128xf32> to vector<2x128xf32>
    %cst_25 = arith.constant dense<0.000000e+00> : vector<2x128xf32>
    %105 = tpu.matmul %102, %2, %cst_25 {dimension_numbers = #tpu.dot_dimension_numbers<[1], [0], [0], [1], [0, 0, 1, 1], [], []>} : vector<2x32xf32>, vector<32x128xf32>, vector<2x128xf32> -> vector<2x128xf32>
    %106 = arith.addf %104, %105 : vector<2x128xf32>
    %107 = arith.negf %106 : vector<2x128xf32>
    %108 = math.exp %107 : vector<2x128xf32>
    %cst_26 = arith.constant 1.000000e+00 : f32
    %109 = vector.broadcast %cst_26 : f32 to vector<2x128xf32>
    %110 = arith.addf %109, %108 : vector<2x128xf32>
    %111 = arith.divf %109, %110 : vector<2x128xf32>
    %112 = math.tanh %106 : vector<2x128xf32>
    %113 = vector.extract_strided_slice %111 {offsets = [0, 0], sizes = [2, 32], strides = [1, 1]} : vector<2x128xf32> to vector<2x32xf32>
    %114 = vector.extract_strided_slice %111 {offsets = [0, 32], sizes = [2, 32], strides = [1, 1]} : vector<2x128xf32> to vector<2x32xf32>
    %115 = vector.extract_strided_slice %112 {offsets = [0, 64], sizes = [2, 32], strides = [1, 1]} : vector<2x128xf32> to vector<2x32xf32>
    %116 = vector.extract_strided_slice %111 {offsets = [0, 96], sizes = [2, 32], strides = [1, 1]} : vector<2x128xf32> to vector<2x32xf32>
    %117 = arith.mulf %114, %100 : vector<2x32xf32>
    %118 = arith.mulf %113, %115 : vector<2x32xf32>
    %119 = arith.addf %117, %118 : vector<2x32xf32>
    %120 = math.tanh %119 : vector<2x32xf32>
    %121 = arith.mulf %116, %120 : vector<2x32xf32>
    %c10 = arith.constant 10 : index
    %c0_27 = arith.constant 0 : index
    %122 = vector.load %arg10[%c10, %c0_27] : memref<16x32xf32, #tpu.memory_space<vmem>>, vector<2x32xf32>
    tpu.vector_store %arg10[%c10, %c0_27], %121 {strides = array<i32>} : memref<16x32xf32, #tpu.memory_space<vmem>>, vector<2x32xf32>,
    %123 = vector.extract_strided_slice %6 {offsets = [12, 0], sizes = [2, 128], strides = [1, 1]} : vector<16x128xf32> to vector<2x128xf32>
    %cst_28 = arith.constant dense<0.000000e+00> : vector<2x128xf32>
    %124 = tpu.matmul %121, %2, %cst_28 {dimension_numbers = #tpu.dot_dimension_numbers<[1], [0], [0], [1], [0, 0, 1, 1], [], []>} : vector<2x32xf32>, vector<32x128xf32>, vector<2x128xf32> -> vector<2x128xf32>
    %125 = arith.addf %123, %124 : vector<2x128xf32>
    %126 = arith.negf %125 : vector<2x128xf32>
    %127 = math.exp %126 : vector<2x128xf32>
    %cst_29 = arith.constant 1.000000e+00 : f32
    %128 = vector.broadcast %cst_29 : f32 to vector<2x128xf32>
    %129 = arith.addf %128, %127 : vector<2x128xf32>
    %130 = arith.divf %128, %129 : vector<2x128xf32>
    %131 = math.tanh %125 : vector<2x128xf32>
    %132 = vector.extract_strided_slice %130 {offsets = [0, 0], sizes = [2, 32], strides = [1, 1]} : vector<2x128xf32> to vector<2x32xf32>
    %133 = vector.extract_strided_slice %130 {offsets = [0, 32], sizes = [2, 32], strides = [1, 1]} : vector<2x128xf32> to vector<2x32xf32>
    %134 = vector.extract_strided_slice %131 {offsets = [0, 64], sizes = [2, 32], strides = [1, 1]} : vector<2x128xf32> to vector<2x32xf32>
    %135 = vector.extract_strided_slice %130 {offsets = [0, 96], sizes = [2, 32], strides = [1, 1]} : vector<2x128xf32> to vector<2x32xf32>
    %136 = arith.mulf %133, %119 : vector<2x32xf32>
    %137 = arith.mulf %132, %134 : vector<2x32xf32>
    %138 = arith.addf %136, %137 : vector<2x32xf32>
    %139 = math.tanh %138 : vector<2x32xf32>
    %140 = arith.mulf %135, %139 : vector<2x32xf32>
    %c12 = arith.constant 12 : index
    %c0_30 = arith.constant 0 : index
    %141 = vector.load %arg10[%c12, %c0_30] : memref<16x32xf32, #tpu.memory_space<vmem>>, vector<2x32xf32>
    tpu.vector_store %arg10[%c12, %c0_30], %140 {strides = array<i32>} : memref<16x32xf32, #tpu.memory_space<vmem>>, vector<2x32xf32>,
    %142 = vector.extract_strided_slice %6 {offsets = [14, 0], sizes = [2, 128], strides = [1, 1]} : vector<16x128xf32> to vector<2x128xf32>
    %cst_31 = arith.constant dense<0.000000e+00> : vector<2x128xf32>
    %143 = tpu.matmul %140, %2, %cst_31 {dimension_numbers = #tpu.dot_dimension_numbers<[1], [0], [0], [1], [0, 0, 1, 1], [], []>} : vector<2x32xf32>, vector<32x128xf32>, vector<2x128xf32> -> vector<2x128xf32>
    %144 = arith.addf %142, %143 : vector<2x128xf32>
    %145 = arith.negf %144 : vector<2x128xf32>
    %146 = math.exp %145 : vector<2x128xf32>
    %cst_32 = arith.constant 1.000000e+00 : f32
    %147 = vector.broadcast %cst_32 : f32 to vector<2x128xf32>
    %148 = arith.addf %147, %146 : vector<2x128xf32>
    %149 = arith.divf %147, %148 : vector<2x128xf32>
    %150 = math.tanh %144 : vector<2x128xf32>
    %151 = vector.extract_strided_slice %149 {offsets = [0, 0], sizes = [2, 32], strides = [1, 1]} : vector<2x128xf32> to vector<2x32xf32>
    %152 = vector.extract_strided_slice %149 {offsets = [0, 32], sizes = [2, 32], strides = [1, 1]} : vector<2x128xf32> to vector<2x32xf32>
    %153 = vector.extract_strided_slice %150 {offsets = [0, 64], sizes = [2, 32], strides = [1, 1]} : vector<2x128xf32> to vector<2x32xf32>
    %154 = vector.extract_strided_slice %149 {offsets = [0, 96], sizes = [2, 32], strides = [1, 1]} : vector<2x128xf32> to vector<2x32xf32>
    %155 = arith.mulf %152, %138 : vector<2x32xf32>
    %156 = arith.mulf %151, %153 : vector<2x32xf32>
    %157 = arith.addf %155, %156 : vector<2x32xf32>
    %158 = math.tanh %157 : vector<2x32xf32>
    %159 = arith.mulf %154, %158 : vector<2x32xf32>
    %c14 = arith.constant 14 : index
    %c0_33 = arith.constant 0 : index
    %160 = vector.load %arg10[%c14, %c0_33] : memref<16x32xf32, #tpu.memory_space<vmem>>, vector<2x32xf32>
    tpu.vector_store %arg10[%c14, %c0_33], %159 {strides = array<i32>} : memref<16x32xf32, #tpu.memory_space<vmem>>, vector<2x32xf32>,
    %c0_34 = arith.constant 0 : index
    %c0_35 = arith.constant 0 : index
    %161 = vector.load %arg10[%c0_34, %c0_35] : memref<16x32xf32, #tpu.memory_space<vmem>>, vector<16x32xf32>
    %c0_36 = arith.constant 0 : index
    %c0_37 = arith.constant 0 : index
    %162 = vector.load %arg4[%c0_36, %c0_37] : memref<32x128xf32, #tpu.memory_space<vmem>>, vector<32x128xf32>
    %c0_38 = arith.constant 0 : index
    %c0_39 = arith.constant 0 : index
    %163 = vector.load %arg5[%c0_38, %c0_39] : memref<32x128xf32, #tpu.memory_space<vmem>>, vector<32x128xf32>
    %c0_40 = arith.constant 0 : index
    %c0_41 = arith.constant 0 : index
    %164 = vector.load %arg6[%c0_40, %c0_41] : memref<1x128xf32, #tpu.memory_space<vmem>>, vector<1x128xf32>
    %cst_42 = arith.constant dense<0.000000e+00> : vector<16x128xf32>
    %165 = tpu.matmul %161, %162, %cst_42 {dimension_numbers = #tpu.dot_dimension_numbers<[1], [0], [0], [1], [0, 0, 1, 1], [], []>} : vector<16x32xf32>, vector<32x128xf32>, vector<16x128xf32> -> vector<16x128xf32>
    %166 = vector.broadcast %164 : vector<1x128xf32> to vector<16x128xf32>
    %167 = arith.addf %165, %166 : vector<16x128xf32>
    %cst_43 = arith.constant 0.000000e+00 : f32
    %168 = vector.broadcast %cst_43 : f32 to vector<2x32xf32>
    %cst_44 = arith.constant 0.000000e+00 : f32
    %169 = vector.broadcast %cst_44 : f32 to vector<2x32xf32>
    %170 = vector.extract_strided_slice %167 {offsets = [0, 0], sizes = [2, 128], strides = [1, 1]} : vector<16x128xf32> to vector<2x128xf32>
    %cst_45 = arith.constant dense<0.000000e+00> : vector<2x128xf32>
    %171 = tpu.matmul %168, %163, %cst_45 {dimension_numbers = #tpu.dot_dimension_numbers<[1], [0], [0], [1], [0, 0, 1, 1], [], []>} : vector<2x32xf32>, vector<32x128xf32>, vector<2x128xf32> -> vector<2x128xf32>
    %172 = arith.addf %170, %171 : vector<2x128xf32>
    %173 = arith.negf %172 : vector<2x128xf32>
    %174 = math.exp %173 : vector<2x128xf32>
    %cst_46 = arith.constant 1.000000e+00 : f32
    %175 = vector.broadcast %cst_46 : f32 to vector<2x128xf32>
    %176 = arith.addf %175, %174 : vector<2x128xf32>
    %177 = arith.divf %175, %176 : vector<2x128xf32>
    %178 = math.tanh %172 : vector<2x128xf32>
    %179 = vector.extract_strided_slice %177 {offsets = [0, 0], sizes = [2, 32], strides = [1, 1]} : vector<2x128xf32> to vector<2x32xf32>
    %180 = vector.extract_strided_slice %177 {offsets = [0, 32], sizes = [2, 32], strides = [1, 1]} : vector<2x128xf32> to vector<2x32xf32>
    %181 = vector.extract_strided_slice %178 {offsets = [0, 64], sizes = [2, 32], strides = [1, 1]} : vector<2x128xf32> to vector<2x32xf32>
    %182 = vector.extract_strided_slice %177 {offsets = [0, 96], sizes = [2, 32], strides = [1, 1]} : vector<2x128xf32> to vector<2x32xf32>
    %183 = arith.mulf %180, %169 : vector<2x32xf32>
    %184 = arith.mulf %179, %181 : vector<2x32xf32>
    %185 = arith.addf %183, %184 : vector<2x32xf32>
    %186 = math.tanh %185 : vector<2x32xf32>
    %187 = arith.mulf %182, %186 : vector<2x32xf32>
    %188 = vector.extract_strided_slice %167 {offsets = [2, 0], sizes = [2, 128], strides = [1, 1]} : vector<16x128xf32> to vector<2x128xf32>
    %cst_47 = arith.constant dense<0.000000e+00> : vector<2x128xf32>
    %189 = tpu.matmul %187, %163, %cst_47 {dimension_numbers = #tpu.dot_dimension_numbers<[1], [0], [0], [1], [0, 0, 1, 1], [], []>} : vector<2x32xf32>, vector<32x128xf32>, vector<2x128xf32> -> vector<2x128xf32>
    %190 = arith.addf %188, %189 : vector<2x128xf32>
    %191 = arith.negf %190 : vector<2x128xf32>
    %192 = math.exp %191 : vector<2x128xf32>
    %cst_48 = arith.constant 1.000000e+00 : f32
    %193 = vector.broadcast %cst_48 : f32 to vector<2x128xf32>
    %194 = arith.addf %193, %192 : vector<2x128xf32>
    %195 = arith.divf %193, %194 : vector<2x128xf32>
    %196 = math.tanh %190 : vector<2x128xf32>
    %197 = vector.extract_strided_slice %195 {offsets = [0, 0], sizes = [2, 32], strides = [1, 1]} : vector<2x128xf32> to vector<2x32xf32>
    %198 = vector.extract_strided_slice %195 {offsets = [0, 32], sizes = [2, 32], strides = [1, 1]} : vector<2x128xf32> to vector<2x32xf32>
    %199 = vector.extract_strided_slice %196 {offsets = [0, 64], sizes = [2, 32], strides = [1, 1]} : vector<2x128xf32> to vector<2x32xf32>
    %200 = vector.extract_strided_slice %195 {offsets = [0, 96], sizes = [2, 32], strides = [1, 1]} : vector<2x128xf32> to vector<2x32xf32>
    %201 = arith.mulf %198, %185 : vector<2x32xf32>
    %202 = arith.mulf %197, %199 : vector<2x32xf32>
    %203 = arith.addf %201, %202 : vector<2x32xf32>
    %204 = math.tanh %203 : vector<2x32xf32>
    %205 = arith.mulf %200, %204 : vector<2x32xf32>
    %206 = vector.extract_strided_slice %167 {offsets = [4, 0], sizes = [2, 128], strides = [1, 1]} : vector<16x128xf32> to vector<2x128xf32>
    %cst_49 = arith.constant dense<0.000000e+00> : vector<2x128xf32>
    %207 = tpu.matmul %205, %163, %cst_49 {dimension_numbers = #tpu.dot_dimension_numbers<[1], [0], [0], [1], [0, 0, 1, 1], [], []>} : vector<2x32xf32>, vector<32x128xf32>, vector<2x128xf32> -> vector<2x128xf32>
    %208 = arith.addf %206, %207 : vector<2x128xf32>
    %209 = arith.negf %208 : vector<2x128xf32>
    %210 = math.exp %209 : vector<2x128xf32>
    %cst_50 = arith.constant 1.000000e+00 : f32
    %211 = vector.broadcast %cst_50 : f32 to vector<2x128xf32>
    %212 = arith.addf %211, %210 : vector<2x128xf32>
    %213 = arith.divf %211, %212 : vector<2x128xf32>
    %214 = math.tanh %208 : vector<2x128xf32>
    %215 = vector.extract_strided_slice %213 {offsets = [0, 0], sizes = [2, 32], strides = [1, 1]} : vector<2x128xf32> to vector<2x32xf32>
    %216 = vector.extract_strided_slice %213 {offsets = [0, 32], sizes = [2, 32], strides = [1, 1]} : vector<2x128xf32> to vector<2x32xf32>
    %217 = vector.extract_strided_slice %214 {offsets = [0, 64], sizes = [2, 32], strides = [1, 1]} : vector<2x128xf32> to vector<2x32xf32>
    %218 = vector.extract_strided_slice %213 {offsets = [0, 96], sizes = [2, 32], strides = [1, 1]} : vector<2x128xf32> to vector<2x32xf32>
    %219 = arith.mulf %216, %203 : vector<2x32xf32>
    %220 = arith.mulf %215, %217 : vector<2x32xf32>
    %221 = arith.addf %219, %220 : vector<2x32xf32>
    %222 = math.tanh %221 : vector<2x32xf32>
    %223 = arith.mulf %218, %222 : vector<2x32xf32>
    %224 = vector.extract_strided_slice %167 {offsets = [6, 0], sizes = [2, 128], strides = [1, 1]} : vector<16x128xf32> to vector<2x128xf32>
    %cst_51 = arith.constant dense<0.000000e+00> : vector<2x128xf32>
    %225 = tpu.matmul %223, %163, %cst_51 {dimension_numbers = #tpu.dot_dimension_numbers<[1], [0], [0], [1], [0, 0, 1, 1], [], []>} : vector<2x32xf32>, vector<32x128xf32>, vector<2x128xf32> -> vector<2x128xf32>
    %226 = arith.addf %224, %225 : vector<2x128xf32>
    %227 = arith.negf %226 : vector<2x128xf32>
    %228 = math.exp %227 : vector<2x128xf32>
    %cst_52 = arith.constant 1.000000e+00 : f32
    %229 = vector.broadcast %cst_52 : f32 to vector<2x128xf32>
    %230 = arith.addf %229, %228 : vector<2x128xf32>
    %231 = arith.divf %229, %230 : vector<2x128xf32>
    %232 = math.tanh %226 : vector<2x128xf32>
    %233 = vector.extract_strided_slice %231 {offsets = [0, 0], sizes = [2, 32], strides = [1, 1]} : vector<2x128xf32> to vector<2x32xf32>
    %234 = vector.extract_strided_slice %231 {offsets = [0, 32], sizes = [2, 32], strides = [1, 1]} : vector<2x128xf32> to vector<2x32xf32>
    %235 = vector.extract_strided_slice %232 {offsets = [0, 64], sizes = [2, 32], strides = [1, 1]} : vector<2x128xf32> to vector<2x32xf32>
    %236 = vector.extract_strided_slice %231 {offsets = [0, 96], sizes = [2, 32], strides = [1, 1]} : vector<2x128xf32> to vector<2x32xf32>
    %237 = arith.mulf %234, %221 : vector<2x32xf32>
    %238 = arith.mulf %233, %235 : vector<2x32xf32>
    %239 = arith.addf %237, %238 : vector<2x32xf32>
    %240 = math.tanh %239 : vector<2x32xf32>
    %241 = arith.mulf %236, %240 : vector<2x32xf32>
    %242 = vector.extract_strided_slice %167 {offsets = [8, 0], sizes = [2, 128], strides = [1, 1]} : vector<16x128xf32> to vector<2x128xf32>
    %cst_53 = arith.constant dense<0.000000e+00> : vector<2x128xf32>
    %243 = tpu.matmul %241, %163, %cst_53 {dimension_numbers = #tpu.dot_dimension_numbers<[1], [0], [0], [1], [0, 0, 1, 1], [], []>} : vector<2x32xf32>, vector<32x128xf32>, vector<2x128xf32> -> vector<2x128xf32>
    %244 = arith.addf %242, %243 : vector<2x128xf32>
    %245 = arith.negf %244 : vector<2x128xf32>
    %246 = math.exp %245 : vector<2x128xf32>
    %cst_54 = arith.constant 1.000000e+00 : f32
    %247 = vector.broadcast %cst_54 : f32 to vector<2x128xf32>
    %248 = arith.addf %247, %246 : vector<2x128xf32>
    %249 = arith.divf %247, %248 : vector<2x128xf32>
    %250 = math.tanh %244 : vector<2x128xf32>
    %251 = vector.extract_strided_slice %249 {offsets = [0, 0], sizes = [2, 32], strides = [1, 1]} : vector<2x128xf32> to vector<2x32xf32>
    %252 = vector.extract_strided_slice %249 {offsets = [0, 32], sizes = [2, 32], strides = [1, 1]} : vector<2x128xf32> to vector<2x32xf32>
    %253 = vector.extract_strided_slice %250 {offsets = [0, 64], sizes = [2, 32], strides = [1, 1]} : vector<2x128xf32> to vector<2x32xf32>
    %254 = vector.extract_strided_slice %249 {offsets = [0, 96], sizes = [2, 32], strides = [1, 1]} : vector<2x128xf32> to vector<2x32xf32>
    %255 = arith.mulf %252, %239 : vector<2x32xf32>
    %256 = arith.mulf %251, %253 : vector<2x32xf32>
    %257 = arith.addf %255, %256 : vector<2x32xf32>
    %258 = math.tanh %257 : vector<2x32xf32>
    %259 = arith.mulf %254, %258 : vector<2x32xf32>
    %260 = vector.extract_strided_slice %167 {offsets = [10, 0], sizes = [2, 128], strides = [1, 1]} : vector<16x128xf32> to vector<2x128xf32>
    %cst_55 = arith.constant dense<0.000000e+00> : vector<2x128xf32>
    %261 = tpu.matmul %259, %163, %cst_55 {dimension_numbers = #tpu.dot_dimension_numbers<[1], [0], [0], [1], [0, 0, 1, 1], [], []>} : vector<2x32xf32>, vector<32x128xf32>, vector<2x128xf32> -> vector<2x128xf32>
    %262 = arith.addf %260, %261 : vector<2x128xf32>
    %263 = arith.negf %262 : vector<2x128xf32>
    %264 = math.exp %263 : vector<2x128xf32>
    %cst_56 = arith.constant 1.000000e+00 : f32
    %265 = vector.broadcast %cst_56 : f32 to vector<2x128xf32>
    %266 = arith.addf %265, %264 : vector<2x128xf32>
    %267 = arith.divf %265, %266 : vector<2x128xf32>
    %268 = math.tanh %262 : vector<2x128xf32>
    %269 = vector.extract_strided_slice %267 {offsets = [0, 0], sizes = [2, 32], strides = [1, 1]} : vector<2x128xf32> to vector<2x32xf32>
    %270 = vector.extract_strided_slice %267 {offsets = [0, 32], sizes = [2, 32], strides = [1, 1]} : vector<2x128xf32> to vector<2x32xf32>
    %271 = vector.extract_strided_slice %268 {offsets = [0, 64], sizes = [2, 32], strides = [1, 1]} : vector<2x128xf32> to vector<2x32xf32>
    %272 = vector.extract_strided_slice %267 {offsets = [0, 96], sizes = [2, 32], strides = [1, 1]} : vector<2x128xf32> to vector<2x32xf32>
    %273 = arith.mulf %270, %257 : vector<2x32xf32>
    %274 = arith.mulf %269, %271 : vector<2x32xf32>
    %275 = arith.addf %273, %274 : vector<2x32xf32>
    %276 = math.tanh %275 : vector<2x32xf32>
    %277 = arith.mulf %272, %276 : vector<2x32xf32>
    %278 = vector.extract_strided_slice %167 {offsets = [12, 0], sizes = [2, 128], strides = [1, 1]} : vector<16x128xf32> to vector<2x128xf32>
    %cst_57 = arith.constant dense<0.000000e+00> : vector<2x128xf32>
    %279 = tpu.matmul %277, %163, %cst_57 {dimension_numbers = #tpu.dot_dimension_numbers<[1], [0], [0], [1], [0, 0, 1, 1], [], []>} : vector<2x32xf32>, vector<32x128xf32>, vector<2x128xf32> -> vector<2x128xf32>
    %280 = arith.addf %278, %279 : vector<2x128xf32>
    %281 = arith.negf %280 : vector<2x128xf32>
    %282 = math.exp %281 : vector<2x128xf32>
    %cst_58 = arith.constant 1.000000e+00 : f32
    %283 = vector.broadcast %cst_58 : f32 to vector<2x128xf32>
    %284 = arith.addf %283, %282 : vector<2x128xf32>
    %285 = arith.divf %283, %284 : vector<2x128xf32>
    %286 = math.tanh %280 : vector<2x128xf32>
    %287 = vector.extract_strided_slice %285 {offsets = [0, 0], sizes = [2, 32], strides = [1, 1]} : vector<2x128xf32> to vector<2x32xf32>
    %288 = vector.extract_strided_slice %285 {offsets = [0, 32], sizes = [2, 32], strides = [1, 1]} : vector<2x128xf32> to vector<2x32xf32>
    %289 = vector.extract_strided_slice %286 {offsets = [0, 64], sizes = [2, 32], strides = [1, 1]} : vector<2x128xf32> to vector<2x32xf32>
    %290 = vector.extract_strided_slice %285 {offsets = [0, 96], sizes = [2, 32], strides = [1, 1]} : vector<2x128xf32> to vector<2x32xf32>
    %291 = arith.mulf %288, %275 : vector<2x32xf32>
    %292 = arith.mulf %287, %289 : vector<2x32xf32>
    %293 = arith.addf %291, %292 : vector<2x32xf32>
    %294 = math.tanh %293 : vector<2x32xf32>
    %295 = arith.mulf %290, %294 : vector<2x32xf32>
    %296 = vector.extract_strided_slice %167 {offsets = [14, 0], sizes = [2, 128], strides = [1, 1]} : vector<16x128xf32> to vector<2x128xf32>
    %cst_59 = arith.constant dense<0.000000e+00> : vector<2x128xf32>
    %297 = tpu.matmul %295, %163, %cst_59 {dimension_numbers = #tpu.dot_dimension_numbers<[1], [0], [0], [1], [0, 0, 1, 1], [], []>} : vector<2x32xf32>, vector<32x128xf32>, vector<2x128xf32> -> vector<2x128xf32>
    %298 = arith.addf %296, %297 : vector<2x128xf32>
    %299 = arith.negf %298 : vector<2x128xf32>
    %300 = math.exp %299 : vector<2x128xf32>
    %cst_60 = arith.constant 1.000000e+00 : f32
    %301 = vector.broadcast %cst_60 : f32 to vector<2x128xf32>
    %302 = arith.addf %301, %300 : vector<2x128xf32>
    %303 = arith.divf %301, %302 : vector<2x128xf32>
    %304 = math.tanh %298 : vector<2x128xf32>
    %305 = vector.extract_strided_slice %303 {offsets = [0, 0], sizes = [2, 32], strides = [1, 1]} : vector<2x128xf32> to vector<2x32xf32>
    %306 = vector.extract_strided_slice %303 {offsets = [0, 32], sizes = [2, 32], strides = [1, 1]} : vector<2x128xf32> to vector<2x32xf32>
    %307 = vector.extract_strided_slice %304 {offsets = [0, 64], sizes = [2, 32], strides = [1, 1]} : vector<2x128xf32> to vector<2x32xf32>
    %308 = vector.extract_strided_slice %303 {offsets = [0, 96], sizes = [2, 32], strides = [1, 1]} : vector<2x128xf32> to vector<2x32xf32>
    %309 = arith.mulf %306, %293 : vector<2x32xf32>
    %310 = arith.mulf %305, %307 : vector<2x32xf32>
    %311 = arith.addf %309, %310 : vector<2x32xf32>
    %312 = math.tanh %311 : vector<2x32xf32>
    %313 = arith.mulf %308, %312 : vector<2x32xf32>
    %c0_61 = arith.constant 0 : index
    %c0_62 = arith.constant 0 : index
    %314 = vector.load %arg7[%c0_61, %c0_62] : memref<32x10xf32, #tpu.memory_space<vmem>>, vector<32x10xf32>
    %cst_63 = arith.constant dense<0.000000e+00> : vector<2x10xf32>
    %315 = tpu.matmul %313, %314, %cst_63 {dimension_numbers = #tpu.dot_dimension_numbers<[1], [0], [0], [1], [0, 0, 1, 1], [], []>} : vector<2x32xf32>, vector<32x10xf32>, vector<2x10xf32> -> vector<2x10xf32>
    %c0_64 = arith.constant 0 : index
    %c0_65 = arith.constant 0 : index
    %316 = vector.load %arg8[%c0_64, %c0_65] : memref<1x10xf32, #tpu.memory_space<vmem>>, vector<1x10xf32>
    %317 = vector.broadcast %316 : vector<1x10xf32> to vector<2x10xf32>
    %318 = arith.addf %315, %317 : vector<2x10xf32>
    %c0_66 = arith.constant 0 : index
    %c0_67 = arith.constant 0 : index
    %319 = vector.load %arg9[%c0_66, %c0_67] : memref<2x10xf32, #tpu.memory_space<vmem>>, vector<2x10xf32>
    tpu.vector_store %arg9[%c0_66, %c0_67], %318 {strides = array<i32>} : memref<2x10xf32, #tpu.memory_space<vmem>>, vector<2x10xf32>,
    return
  }
}

</mosaic_0001>

<llo_original>
// kernel: _rnn_forward_impl.1
$region0: #{_rnn_forward_impl.1}
  #allocation0 [shape = 'u32[]', space=smem, size = 0x4, offset = 0x4, fixed_abs, tag = 'smem constant byte address 0x4 - core index']
  #allocation1 [shape = 'u32[144,128]{1,0:T(1,128)}', space=vmem, size = 0x12000, scoped, tag = 'internal scratch']
  #allocation2 [shape = 'f32[16,32]{1,0:T(8,128)}', space=vmem, size = 0x2000, scoped, tag = 'scratch operand']
  %s0 = inlined_call_operand.vmem [shape: f32[16,16], index: 0, kind: input, shape index: {}]
  %s1 = inlined_call_operand.vmem [shape: f32[16,128], index: 1, kind: input, shape index: {}]
  %s2 = inlined_call_operand.vmem [shape: f32[32,128], index: 2, kind: input, shape index: {}]
  %s3 = inlined_call_operand.hbm [shape: f32[1,128], index: 3, kind: input, shape index: {}]
  %s4 = inlined_call_operand.vmem [shape: f32[32,128], index: 4, kind: input, shape index: {}]
  %s5 = inlined_call_operand.hbm [shape: f32[32,128], index: 5, kind: input, shape index: {}]
  %s6 = inlined_call_operand.hbm [shape: f32[1,128], index: 6, kind: input, shape index: {}]
  %s7 = inlined_call_operand.vmem [shape: f32[32,10], index: 7, kind: input, shape index: {}]
  %s8 = inlined_call_operand.hbm [shape: f32[1,10], index: 8, kind: input, shape index: {}]
  %s9 = inlined_call_operand.hbm [shape: f32[2,10], index: 9, kind: output, shape index: {}]
  %s10 = sld [smem:[#allocation0]]
  $region62: #{_rnn_forward_impl.1} parent=0
    _
  %s12 = ssub.s32 1, %s10
  %s13 = scalar_select 0, %s12, %s10
  $region1: #{_rnn_forward_impl.1} parent=0
    #allocation3 [shape = 'u8[512]{0}', space=vmem, size = 0x400, scoped, tag = 'input window, operand 3, single buffered']
    #allocation4 [shape = 's32[1]{0}', space=sflag, size = 0x4, scoped, tag = 'scoped memory for _rnn_forward_impl.1']
    #allocation5 [shape = 's32[1]{0}', space=sflag, size = 0x4, scoped, tag = 'scoped memory for _rnn_forward_impl.1']
    #allocation6 [shape = 'u8[16384]{0}', space=vmem, size = 0x4000, scoped, tag = 'input window, operand 5, single buffered']
    #allocation7 [shape = 's32[1]{0}', space=sflag, size = 0x4, scoped, tag = 'scoped memory for _rnn_forward_impl.1']
    #allocation8 [shape = 'u8[512]{0}', space=vmem, size = 0x400, scoped, tag = 'input window, operand 6, single buffered']
    #allocation9 [shape = 'u8[512]{0}', space=vmem, size = 0x400, scoped, tag = 'input window, operand 8, single buffered']
    #allocation10 [shape = 's32[1]{0}', space=sflag, size = 0x4, scoped, tag = 'scoped memory for _rnn_forward_impl.1']
    #allocation11 [shape = 'u8[1024]{0}', space=vmem, size = 0x400, scoped, tag = 'output window, operand 0, single buffered']
    %14 = vsyncpa [#allocation4], 0
    %15 = vsyncpa [#allocation7], 0
    %16 = vsyncpa [#allocation10], 0
    %17 = vsyncpa [#allocation5], 0
    // Predicated region
    $region2: #{_rnn_forward_impl.1} parent=1 // pred_check
      _
    $region3: #{_rnn_forward_impl.1} parent=1 // pred_check_branch
      %19 = sbr.rel (0) target = $region5
    $region4: #{_rnn_forward_impl.1} parent=1 // pred_region
      _
    $region5: #{_rnn_forward_impl.1} parent=1 // pred_fallthru
      _
    // Predicated region
    $region6: #{_rnn_forward_impl.1} parent=1 // pred_check
      _
    $region7: #{_rnn_forward_impl.1} parent=1 // pred_check_branch
      %21 = sbr.rel (0) target = $region9
    $region8: #{_rnn_forward_impl.1} parent=1 // pred_region
      _
    $region9: #{_rnn_forward_impl.1} parent=1 // pred_fallthru
      _
    // Predicated region
    $region10: #{_rnn_forward_impl.1} parent=1 // pred_check
      _
    $region11: #{_rnn_forward_impl.1} parent=1 // pred_check_branch
      %23 = sbr.rel (0) target = $region13
    $region12: #{_rnn_forward_impl.1} parent=1 // pred_region
      _
    $region13: #{_rnn_forward_impl.1} parent=1 // pred_fallthru
      _
    // Predicated region
    $region14: #{_rnn_forward_impl.1} parent=1 // pred_check
      _
    $region15: #{_rnn_forward_impl.1} parent=1 // pred_check_branch
      %25 = sbr.rel (0) target = $region17
    $region16: #{_rnn_forward_impl.1} parent=1 // pred_region
      %s27 = ssub.s32 16, 16
      %28 = vsyncadd [#allocation4], %s27
      %s30 = sshll.u32 [#allocation3], 4
      %s31 = int_to_ptr.vmem [resolvable:$true] %s30
      %33 = dma.hbm_to_vmem [thread:$0]  %s3, 16, %s31, [#allocation4]
    $region17: #{_rnn_forward_impl.1} parent=1 // pred_fallthru
      _
    // Predicated region
    $region18: #{_rnn_forward_impl.1} parent=1 // pred_check
      _
    $region19: #{_rnn_forward_impl.1} parent=1 // pred_check_branch
      %35 = sbr.rel (0) target = $region21
    $region20: #{_rnn_forward_impl.1} parent=1 // pred_region
      _
    $region21: #{_rnn_forward_impl.1} parent=1 // pred_fallthru
      _
    // Predicated region
    $region22: #{_rnn_forward_impl.1} parent=1 // pred_check
      _
    $region23: #{_rnn_forward_impl.1} parent=1 // pred_check_branch
      %37 = sbr.rel (0) target = $region25
    $region24: #{_rnn_forward_impl.1} parent=1 // pred_region
      %s39 = ssub.s32 512, 512
      %40 = vsyncadd [#allocation7], %s39
      %s41 = sshll.u32 [#allocation6], 4
      %s42 = int_to_ptr.vmem [resolvable:$true] %s41
      %47 = dma.hbm_to_vmem [thread:$0]  %s5, 512, %s42, [#allocation7], 128, 128, 8
    $region25: #{_rnn_forward_impl.1} parent=1 // pred_fallthru
      _
    // Predicated region
    $region26: #{_rnn_forward_impl.1} parent=1 // pred_check
      _
    $region27: #{_rnn_forward_impl.1} parent=1 // pred_check_branch
      %49 = sbr.rel (0) target = $region29
    $region28: #{_rnn_forward_impl.1} parent=1 // pred_region
      %s51 = ssub.s32 16, 16
      %52 = vsyncadd [#allocation7], %s51
      %s54 = sshll.u32 [#allocation8], 4
      %s55 = int_to_ptr.vmem [resolvable:$true] %s54
      %57 = dma.hbm_to_vmem [thread:$0]  %s6, 16, %s55, [#allocation7]
    $region29: #{_rnn_forward_impl.1} parent=1 // pred_fallthru
      _
    // Predicated region
    $region30: #{_rnn_forward_impl.1} parent=1 // pred_check
      _
    $region31: #{_rnn_forward_impl.1} parent=1 // pred_check_branch
      %59 = sbr.rel (0) target = $region33
    $region32: #{_rnn_forward_impl.1} parent=1 // pred_region
      _
    $region33: #{_rnn_forward_impl.1} parent=1 // pred_fallthru
      _
    // Predicated region
    $region34: #{_rnn_forward_impl.1} parent=1 // pred_check
      _
    $region35: #{_rnn_forward_impl.1} parent=1 // pred_check_branch
      %61 = sbr.rel (0) target = $region37
    $region36: #{_rnn_forward_impl.1} parent=1 // pred_region
      %s63 = ssub.s32 16, 16
      %64 = vsyncadd [#allocation10], %s63
      %s66 = sshll.u32 [#allocation9], 4
      %s67 = int_to_ptr.vmem [resolvable:$true] %s66
      %69 = dma.hbm_to_vmem [thread:$0]  %s8, 16, %s67, [#allocation10]
    $region37: #{_rnn_forward_impl.1} parent=1 // pred_fallthru
      _
    // Predicated region
    $region38: #{_rnn_forward_impl.1} parent=1 // pred_check
      _
    $region39: #{_rnn_forward_impl.1} parent=1 // pred_check_branch
      %71 = sbr.rel (0) target = $region41
    $region40: #{_rnn_forward_impl.1} parent=1 // pred_region
      %72 = dma.done [#allocation4], 16
    $region41: #{_rnn_forward_impl.1} parent=1 // pred_fallthru
      _
    // Predicated region
    $region42: #{_rnn_forward_impl.1} parent=1 // pred_check
      _
    $region43: #{_rnn_forward_impl.1} parent=1 // pred_check_branch
      %74 = sbr.rel (0) target = $region45
    $region44: #{_rnn_forward_impl.1} parent=1 // pred_region
      %75 = dma.done [#allocation7], 512
    $region45: #{_rnn_forward_impl.1} parent=1 // pred_fallthru
      _
    // Predicated region
    $region46: #{_rnn_forward_impl.1} parent=1 // pred_check
      _
    $region47: #{_rnn_forward_impl.1} parent=1 // pred_check_branch
      %77 = sbr.rel (0) target = $region49
    $region48: #{_rnn_forward_impl.1} parent=1 // pred_region
      %78 = dma.done [#allocation7], 16
    $region49: #{_rnn_forward_impl.1} parent=1 // pred_fallthru
      _
    // Predicated region
    $region50: #{_rnn_forward_impl.1} parent=1 // pred_check
      _
    $region51: #{_rnn_forward_impl.1} parent=1 // pred_check_branch
      %80 = sbr.rel (0) target = $region53
    $region52: #{_rnn_forward_impl.1} parent=1 // pred_region
      %81 = dma.done [#allocation10], 16
    $region53: #{_rnn_forward_impl.1} parent=1 // pred_fallthru
      _
    %v82 = vld [vmem:[%s0] sm:$0xff]
    %v83 = vld [vmem:[%s0 + $0x8] sm:$0xff]
    %v84 = vld [vmem:[%s1] sm:$0xff]
    %v85 = vld [vmem:[%s1 + $0x8] sm:$0xff]
    %v86 = vld [vmem:[%s2] sm:$0xff]
    %v87 = vld [vmem:[%s2 + $0x8] sm:$0xff]
    %v88 = vld [vmem:[%s2 + $0x10] sm:$0xff]
    %v89 = vld [vmem:[%s2 + $0x18] sm:$0xff]
    %v90 = vld [vmem:[#allocation3] sm:$0x1]
    %v92 = vlaneseq
    %v93 = vshrl.u32 %v92, 7
    %v94 = vsub.s32 0, %v93
    %v95 = vrot.slane %v90, %v94
    %vm97 = vcmask 130048
    %v99 = vsel %vm97, %v82, 0
    %v102 = vsel %vm97, %v83, 0
    %104 = vmatprep.subr.mxu0 0.0
    %105 = vmatpush1.msra.mxu0 0.0
    %106 = vmatprep.subr.mxu0 0.0
    %107 = vmatpush1.msra.mxu0 0.0
    %108 = vmatprep.subr.mxu0 0.0
    %109 = vmatpush1.msra.mxu0 0.0
    %110 = vmatprep.subr.mxu0 0.0
    %111 = vmatpush1.msra.mxu0 0.0
    %112 = vmatprep.subr.mxu0 0.0
    %113 = vmatpush1.msra.mxu0 0.0
    %114 = vmatprep.subr.mxu0 0.0
    %115 = vmatpush1.msra.mxu0 0.0
    %116 = vmatprep.subr.mxu0 0.0
    %117 = vmatpush1.msra.mxu0 0.0
    %118 = vmatprep.subr.mxu0 0.0
    %119 = vmatpush1.msra.mxu0 0.0
    %120 = vmatprep.subr.mxu0 0.0
    %121 = vmatpush1.msra.mxu0 0.0
    %122 = vmatprep.subr.mxu0 0.0
    %123 = vmatpush1.msra.mxu0 0.0
    %124 = vmatprep.subr.mxu0 0.0
    %125 = vmatpush1.msra.mxu0 0.0
    %126 = vmatprep.subr.mxu0 0.0
    %127 = vmatpush1.msra.mxu0 0.0
    %128 = vmatprep.subr.mxu0 0.0
    %129 = vmatpush1.msra.mxu0 0.0
    %130 = vmatprep.subr.mxu0 0.0
    %131 = vmatpush1.msra.mxu0 0.0
    %132 = vmatprep.subr.mxu0 0.0
    %133 = vmatpush1.msra.mxu0 %v85
    %134 = vmatprep.subr.mxu0 0.0
    %135 = vmatpush1.msra.mxu0 %v84
    %136 = vmatprep.subr.mxu0 0.0
    %137 = vmatpush2.msra.mxu0 0.0
    %138 = vmatprep.subr.mxu0 0.0
    %139 = vmatpush2.msra.mxu0 0.0
    %140 = vmatprep.subr.mxu0 0.0
    %141 = vmatpush2.msra.mxu0 0.0
    %142 = vmatprep.subr.mxu0 0.0
    %143 = vmatpush2.msra.mxu0 0.0
    %144 = vmatprep.subr.mxu0 0.0
    %145 = vmatpush2.msra.mxu0 0.0
    %146 = vmatprep.subr.mxu0 0.0
    %147 = vmatpush2.msra.mxu0 0.0
    %148 = vmatprep.subr.mxu0 0.0
    %149 = vmatpush2.msra.mxu0 0.0
    %150 = vmatprep.subr.mxu0 0.0
    %151 = vmatpush2.msra.mxu0 0.0
    %152 = vmatprep.subr.mxu0 0.0
    %153 = vmatpush2.msra.mxu0 0.0
    %154 = vmatprep.subr.mxu0 0.0
    %155 = vmatpush2.msra.mxu0 0.0
    %156 = vmatprep.subr.mxu0 0.0
    %157 = vmatpush2.msra.mxu0 0.0
    %158 = vmatprep.subr.mxu0 0.0
    %159 = vmatpush2.msra.mxu0 0.0
    %160 = vmatprep.subr.mxu0 0.0
    %161 = vmatpush2.msra.mxu0 0.0
    %162 = vmatprep.subr.mxu0 0.0
    %163 = vmatpush2.msra.mxu0 0.0
    %164 = vmatprep.subr.mxu0 0.0
    %165 = vmatpush2.msra.mxu0 0.0
    %166 = vmatprep.subr.mxu0 0.0
    %167 = vmatpush2.msra.mxu0 0.0
    %168 = vmatprep.mubr.f32.mxu0 0.0
    %169 = vmatmul.mubr.f32.gmra.mxu0 %v99
    %v170 = vpop.f32.mrf.mxu0
    %v171 = vadd.f32 %v95, %v170
    %v172 = vpop.f32.mrf.mxu0
    %173 = vmatprep.mubr.f32.mxu0 0.0
    %174 = vmatmul.mubr.f32.gmra.mxu0 %v102
    %v175 = vpop.f32.mrf.mxu0
    %v176 = vadd.f32 %v95, %v175
    %v177 = vpop.f32.mrf.mxu0
    %178 = vdwg.mxu0
    %vm179 = vcmask 261120
    %v181 = vsel %vm179, 0.0, 0
    %183 = vmatprep.subr.mxu0 0.0
    %184 = vmatpush1.msra.mxu0 0.0
    %185 = vmatprep.subr.mxu0 0.0
    %186 = vmatpush1.msra.mxu0 0.0
    %187 = vmatprep.subr.mxu0 0.0
    %188 = vmatpush1.msra.mxu0 0.0
    %189 = vmatprep.subr.mxu0 0.0
    %190 = vmatpush1.msra.mxu0 0.0
    %191 = vmatprep.subr.mxu0 0.0
    %192 = vmatpush1.msra.mxu0 0.0
    %193 = vmatprep.subr.mxu0 0.0
    %194 = vmatpush1.msra.mxu0 0.0
    %195 = vmatprep.subr.mxu0 0.0
    %196 = vmatpush1.msra.mxu0 0.0
    %197 = vmatprep.subr.mxu0 0.0
    %198 = vmatpush1.msra.mxu0 0.0
    %199 = vmatprep.subr.mxu0 0.0
    %200 = vmatpush1.msra.mxu0 0.0
    %201 = vmatprep.subr.mxu0 0.0
    %202 = vmatpush1.msra.mxu0 0.0
    %203 = vmatprep.subr.mxu0 0.0
    %204 = vmatpush1.msra.mxu0 0.0
    %205 = vmatprep.subr.mxu0 0.0
    %206 = vmatpush1.msra.mxu0 0.0
    %207 = vmatprep.subr.mxu0 0.0
    %208 = vmatpush1.msra.mxu0 %v89
    %209 = vmatprep.subr.mxu0 0.0
    %210 = vmatpush1.msra.mxu0 %v88
    %211 = vmatprep.subr.mxu0 0.0
    %212 = vmatpush1.msra.mxu0 %v87
    %213 = vmatprep.subr.mxu0 0.0
    %214 = vmatpush1.msra.mxu0 %v86
    %215 = vmatprep.subr.mxu0 0.0
    %216 = vmatpush2.msra.mxu0 0.0
    %217 = vmatprep.subr.mxu0 0.0
    %218 = vmatpush2.msra.mxu0 0.0
    %219 = vmatprep.subr.mxu0 0.0
    %220 = vmatpush2.msra.mxu0 0.0
    %221 = vmatprep.subr.mxu0 0.0
    %222 = vmatpush2.msra.mxu0 0.0
    %223 = vmatprep.subr.mxu0 0.0
    %224 = vmatpush2.msra.mxu0 0.0
    %225 = vmatprep.subr.mxu0 0.0
    %226 = vmatpush2.msra.mxu0 0.0
    %227 = vmatprep.subr.mxu0 0.0
    %228 = vmatpush2.msra.mxu0 0.0
    %229 = vmatprep.subr.mxu0 0.0
    %230 = vmatpush2.msra.mxu0 0.0
    %231 = vmatprep.subr.mxu0 0.0
    %232 = vmatpush2.msra.mxu0 0.0
    %233 = vmatprep.subr.mxu0 0.0
    %234 = vmatpush2.msra.mxu0 0.0
    %235 = vmatprep.subr.mxu0 0.0
    %236 = vmatpush2.msra.mxu0 0.0
    %237 = vmatprep.subr.mxu0 0.0
    %238 = vmatpush2.msra.mxu0 0.0
    %239 = vmatprep.subr.mxu0 0.0
    %240 = vmatpush2.msra.mxu0 0.0
    %241 = vmatprep.subr.mxu0 0.0
    %242 = vmatpush2.msra.mxu0 0.0
    %243 = vmatprep.subr.mxu0 0.0
    %244 = vmatpush2.msra.mxu0 0.0
    %245 = vmatprep.subr.mxu0 0.0
    %246 = vmatpush2.msra.mxu0 0.0
    %247 = vmatprep.mubr.f32.mxu0 0.0
    %248 = vmatmul.mubr.f32.gmra.mxu0 %v181
    %v249 = vpop.f32.mrf.mxu0
    %v250 = vadd.f32 0.0, %v249
    %v251 = vpop.f32.mrf.mxu0
    %252 = vdwg.mxu0
    %v253 = vadd.f32 %v171, %v250
    %v254 = vxor.u32 %v253, 2147483648
    %v255 = vmul.f32 %v254, 1.442695
    %v256 = vpow.pop %v255
    %v257 = vadd.f32 %v256, 1.0
    %v258 = vrcp.pop %v257
    %v259 = vmul.f32 1.0, %v258
    %v260 = vtanh.pop %v253
    %v261 = vmul.f32 %v259, 0.0
    %263 = vrot.lane.b32.xlu0 %v260, 64
    %v264 = vpop.permute.xlu0 %263
    %v266 = vmul.f32 %v259, %v264
    %268 = vrot.lane.b32.xlu0 %v266, 32
    %v269 = vpop.permute.xlu0 %268
    %v271 = vadd.f32 %v261, %v269
    %v272 = vtanh.pop %v271
    %274 = vrot.lane.b32.xlu0 %v272, 64
    %v275 = vpop.permute.xlu0 %274
    %v277 = vmul.f32 %v259, %v275
    %279 = vrot.lane.b32.xlu0 %v277, 32
    %v280 = vpop.permute.xlu0 %279
    %vm282 = vcmask 254976
    %283 = vst.msk [vmem:[#allocation2] sm:$0x3] %vm282, %v280
    %v284 = vsel %vm179, %v280, 0
    %286 = vmatprep.subr.mxu0 0.0
    %287 = vmatpush1.msra.mxu0 0.0
    %288 = vmatprep.subr.mxu0 0.0
    %289 = vmatpush1.msra.mxu0 0.0
    %290 = vmatprep.subr.mxu0 0.0
    %291 = vmatpush1.msra.mxu0 0.0
    %292 = vmatprep.subr.mxu0 0.0
    %293 = vmatpush1.msra.mxu0 0.0
    %294 = vmatprep.subr.mxu0 0.0
    %295 = vmatpush1.msra.mxu0 0.0
    %296 = vmatprep.subr.mxu0 0.0
    %297 = vmatpush1.msra.mxu0 0.0
    %298 = vmatprep.subr.mxu0 0.0
    %299 = vmatpush1.msra.mxu0 0.0
    %300 = vmatprep.subr.mxu0 0.0
    %301 = vmatpush1.msra.mxu0 0.0
    %302 = vmatprep.subr.mxu0 0.0
    %303 = vmatpush1.msra.mxu0 0.0
    %304 = vmatprep.subr.mxu0 0.0
    %305 = vmatpush1.msra.mxu0 0.0
    %306 = vmatprep.subr.mxu0 0.0
    %307 = vmatpush1.msra.mxu0 0.0
    %308 = vmatprep.subr.mxu0 0.0
    %309 = vmatpush1.msra.mxu0 0.0
    %310 = vmatprep.subr.mxu0 0.0
    %311 = vmatpush1.msra.mxu0 %v89
    %312 = vmatprep.subr.mxu0 0.0
    %313 = vmatpush1.msra.mxu0 %v88
    %314 = vmatprep.subr.mxu0 0.0
    %315 = vmatpush1.msra.mxu0 %v87
    %316 = vmatprep.subr.mxu0 0.0
    %317 = vmatpush1.msra.mxu0 %v86
    %318 = vmatprep.subr.mxu0 0.0
    %319 = vmatpush2.msra.mxu0 0.0
    %320 = vmatprep.subr.mxu0 0.0
    %321 = vmatpush2.msra.mxu0 0.0
    %322 = vmatprep.subr.mxu0 0.0
    %323 = vmatpush2.msra.mxu0 0.0
    %324 = vmatprep.subr.mxu0 0.0
    %325 = vmatpush2.msra.mxu0 0.0
    %326 = vmatprep.subr.mxu0 0.0
    %327 = vmatpush2.msra.mxu0 0.0
    %328 = vmatprep.subr.mxu0 0.0
    %329 = vmatpush2.msra.mxu0 0.0
    %330 = vmatprep.subr.mxu0 0.0
    %331 = vmatpush2.msra.mxu0 0.0
    %332 = vmatprep.subr.mxu0 0.0
    %333 = vmatpush2.msra.mxu0 0.0
    %334 = vmatprep.subr.mxu0 0.0
    %335 = vmatpush2.msra.mxu0 0.0
    %336 = vmatprep.subr.mxu0 0.0
    %337 = vmatpush2.msra.mxu0 0.0
    %338 = vmatprep.subr.mxu0 0.0
    %339 = vmatpush2.msra.mxu0 0.0
    %340 = vmatprep.subr.mxu0 0.0
    %341 = vmatpush2.msra.mxu0 0.0
    %342 = vmatprep.subr.mxu0 0.0
    %343 = vmatpush2.msra.mxu0 0.0
    %344 = vmatprep.subr.mxu0 0.0
    %345 = vmatpush2.msra.mxu0 0.0
    %346 = vmatprep.subr.mxu0 0.0
    %347 = vmatpush2.msra.mxu0 0.0
    %348 = vmatprep.subr.mxu0 0.0
    %349 = vmatpush2.msra.mxu0 0.0
    %350 = vmatprep.mubr.f32.mxu0 0.0
    %351 = vmatmul.mubr.f32.gmra.mxu0 %v284
    %v352 = vpop.f32.mrf.mxu0
    %v353 = vadd.f32 0.0, %v352
    %v354 = vpop.f32.mrf.mxu0
    %355 = vdwg.mxu0
    %v357 = vrot.slane %v353, 6
    %v359 = vadd.f32 %v171, %v357
    %v360 = vxor.u32 %v359, 2147483648
    %v361 = vmul.f32 %v360, 1.442695
    %v362 = vpow.pop %v361
    %v363 = vadd.f32 %v362, 1.0
    %v364 = vrcp.pop %v363
    %v365 = vmul.f32 1.0, %v364
    %v366 = vtanh.pop %v359
    %v368 = vrot.slane %v271, 6
    %v370 = vmul.f32 %v365, %v368
    %372 = vrot.lane.b32.xlu0 %v366, 64
    %v373 = vpop.permute.xlu0 %372
    %v375 = vmul.f32 %v365, %v373
    %377 = vrot.lane.b32.xlu0 %v375, 32
    %v378 = vpop.permute.xlu0 %377
    %v380 = vadd.f32 %v370, %v378
    %v381 = vtanh.pop %v380
    %383 = vrot.lane.b32.xlu0 %v381, 64
    %v384 = vpop.permute.xlu0 %383
    %v386 = vmul.f32 %v365, %v384
    %388 = vrot.lane.b32.xlu0 %v386, 32
    %v389 = vpop.permute.xlu0 %388
    %vm391 = vcmask 257026
    %392 = vst.msk [vmem:[#allocation2] sm:$0xc] %vm391, %v389
    %v393 = vrot.slane %v386, 2
    %394 = vrot.lane.b32.xlu0 %v393, 32
    %v395 = vpop.permute.xlu0 %394
    %v396 = vsel %vm179, %v395, 0
    %398 = vmatprep.subr.mxu0 0.0
    %399 = vmatpush1.msra.mxu0 0.0
    %400 = vmatprep.subr.mxu0 0.0
    %401 = vmatpush1.msra.mxu0 0.0
    %402 = vmatprep.subr.mxu0 0.0
    %403 = vmatpush1.msra.mxu0 0.0
    %404 = vmatprep.subr.mxu0 0.0
    %405 = vmatpush1.msra.mxu0 0.0
    %406 = vmatprep.subr.mxu0 0.0
    %407 = vmatpush1.msra.mxu0 0.0
    %408 = vmatprep.subr.mxu0 0.0
    %409 = vmatpush1.msra.mxu0 0.0
    %410 = vmatprep.subr.mxu0 0.0
    %411 = vmatpush1.msra.mxu0 0.0
    %412 = vmatprep.subr.mxu0 0.0
    %413 = vmatpush1.msra.mxu0 0.0
    %414 = vmatprep.subr.mxu0 0.0
    %415 = vmatpush1.msra.mxu0 0.0
    %416 = vmatprep.subr.mxu0 0.0
    %417 = vmatpush1.msra.mxu0 0.0
    %418 = vmatprep.subr.mxu0 0.0
    %419 = vmatpush1.msra.mxu0 0.0
    %420 = vmatprep.subr.mxu0 0.0
    %421 = vmatpush1.msra.mxu0 0.0
    %422 = vmatprep.subr.mxu0 0.0
    %423 = vmatpush1.msra.mxu0 %v89
    %424 = vmatprep.subr.mxu0 0.0
    %425 = vmatpush1.msra.mxu0 %v88
    %426 = vmatprep.subr.mxu0 0.0
    %427 = vmatpush1.msra.mxu0 %v87
    %428 = vmatprep.subr.mxu0 0.0
    %429 = vmatpush1.msra.mxu0 %v86
    %430 = vmatprep.subr.mxu0 0.0
    %431 = vmatpush2.msra.mxu0 0.0
    %432 = vmatprep.subr.mxu0 0.0
    %433 = vmatpush2.msra.mxu0 0.0
    %434 = vmatprep.subr.mxu0 0.0
    %435 = vmatpush2.msra.mxu0 0.0
    %436 = vmatprep.subr.mxu0 0.0
    %437 = vmatpush2.msra.mxu0 0.0
    %438 = vmatprep.subr.mxu0 0.0
    %439 = vmatpush2.msra.mxu0 0.0
    %440 = vmatprep.subr.mxu0 0.0
    %441 = vmatpush2.msra.mxu0 0.0
    %442 = vmatprep.subr.mxu0 0.0
    %443 = vmatpush2.msra.mxu0 0.0
    %444 = vmatprep.subr.mxu0 0.0
    %445 = vmatpush2.msra.mxu0 0.0
    %446 = vmatprep.subr.mxu0 0.0
    %447 = vmatpush2.msra.mxu0 0.0
    %448 = vmatprep.subr.mxu0 0.0
    %449 = vmatpush2.msra.mxu0 0.0
    %450 = vmatprep.subr.mxu0 0.0
    %451 = vmatpush2.msra.mxu0 0.0
    %452 = vmatprep.subr.mxu0 0.0
    %453 = vmatpush2.msra.mxu0 0.0
    %454 = vmatprep.subr.mxu0 0.0
    %455 = vmatpush2.msra.mxu0 0.0
    %456 = vmatprep.subr.mxu0 0.0
    %457 = vmatpush2.msra.mxu0 0.0
    %458 = vmatprep.subr.mxu0 0.0
    %459 = vmatpush2.msra.mxu0 0.0
    %460 = vmatprep.subr.mxu0 0.0
    %461 = vmatpush2.msra.mxu0 0.0
    %462 = vmatprep.mubr.f32.mxu0 0.0
    %463 = vmatmul.mubr.f32.gmra.mxu0 %v396
    %v464 = vpop.f32.mrf.mxu0
    %v465 = vadd.f32 0.0, %v464
    %v466 = vpop.f32.mrf.mxu0
    %467 = vdwg.mxu0
    %v469 = vrot.slane %v465, 4
    %v471 = vadd.f32 %v171, %v469
    %v472 = vxor.u32 %v471, 2147483648
    %v473 = vmul.f32 %v472, 1.442695
    %v474 = vpow.pop %v473
    %v475 = vadd.f32 %v474, 1.0
    %v476 = vrcp.pop %v475
    %v477 = vmul.f32 1.0, %v476
    %v478 = vtanh.pop %v471
    %v480 = vrot.slane %v380, 6
    %v482 = vmul.f32 %v477, %v480
    %484 = vrot.lane.b32.xlu0 %v478, 64
    %v485 = vpop.permute.xlu0 %484
    %v487 = vmul.f32 %v477, %v485
    %489 = vrot.lane.b32.xlu0 %v487, 32
    %v490 = vpop.permute.xlu0 %489
    %v492 = vadd.f32 %v482, %v490
    %v493 = vtanh.pop %v492
    %495 = vrot.lane.b32.xlu0 %v493, 64
    %v496 = vpop.permute.xlu0 %495
    %v498 = vmul.f32 %v477, %v496
    %500 = vrot.lane.b32.xlu0 %v498, 32
    %v501 = vpop.permute.xlu0 %500
    %vm503 = vcmask 259076
    %504 = vst.msk [vmem:[#allocation2] sm:$0x30] %vm503, %v501
    %v505 = vrot.slane %v498, 4
    %506 = vrot.lane.b32.xlu0 %v505, 32
    %v507 = vpop.permute.xlu0 %506
    %v508 = vsel %vm179, %v507, 0
    %510 = vmatprep.subr.mxu0 0.0
    %511 = vmatpush1.msra.mxu0 0.0
    %512 = vmatprep.subr.mxu0 0.0
    %513 = vmatpush1.msra.mxu0 0.0
    %514 = vmatprep.subr.mxu0 0.0
    %515 = vmatpush1.msra.mxu0 0.0
    %516 = vmatprep.subr.mxu0 0.0
    %517 = vmatpush1.msra.mxu0 0.0
    %518 = vmatprep.subr.mxu0 0.0
    %519 = vmatpush1.msra.mxu0 0.0
    %520 = vmatprep.subr.mxu0 0.0
    %521 = vmatpush1.msra.mxu0 0.0
    %522 = vmatprep.subr.mxu0 0.0
    %523 = vmatpush1.msra.mxu0 0.0
    %524 = vmatprep.subr.mxu0 0.0
    %525 = vmatpush1.msra.mxu0 0.0
    %526 = vmatprep.subr.mxu0 0.0
    %527 = vmatpush1.msra.mxu0 0.0
    %528 = vmatprep.subr.mxu0 0.0
    %529 = vmatpush1.msra.mxu0 0.0
    %530 = vmatprep.subr.mxu0 0.0
    %531 = vmatpush1.msra.mxu0 0.0
    %532 = vmatprep.subr.mxu0 0.0
    %533 = vmatpush1.msra.mxu0 0.0
    %534 = vmatprep.subr.mxu0 0.0
    %535 = vmatpush1.msra.mxu0 %v89
    %536 = vmatprep.subr.mxu0 0.0
    %537 = vmatpush1.msra.mxu0 %v88
    %538 = vmatprep.subr.mxu0 0.0
    %539 = vmatpush1.msra.mxu0 %v87
    %540 = vmatprep.subr.mxu0 0.0
    %541 = vmatpush1.msra.mxu0 %v86
    %542 = vmatprep.subr.mxu0 0.0
    %543 = vmatpush2.msra.mxu0 0.0
    %544 = vmatprep.subr.mxu0 0.0
    %545 = vmatpush2.msra.mxu0 0.0
    %546 = vmatprep.subr.mxu0 0.0
    %547 = vmatpush2.msra.mxu0 0.0
    %548 = vmatprep.subr.mxu0 0.0
    %549 = vmatpush2.msra.mxu0 0.0
    %550 = vmatprep.subr.mxu0 0.0
    %551 = vmatpush2.msra.mxu0 0.0
    %552 = vmatprep.subr.mxu0 0.0
    %553 = vmatpush2.msra.mxu0 0.0
    %554 = vmatprep.subr.mxu0 0.0
    %555 = vmatpush2.msra.mxu0 0.0
    %556 = vmatprep.subr.mxu0 0.0
    %557 = vmatpush2.msra.mxu0 0.0
    %558 = vmatprep.subr.mxu0 0.0
    %559 = vmatpush2.msra.mxu0 0.0
    %560 = vmatprep.subr.mxu0 0.0
    %561 = vmatpush2.msra.mxu0 0.0
    %562 = vmatprep.subr.mxu0 0.0
    %563 = vmatpush2.msra.mxu0 0.0
    %564 = vmatprep.subr.mxu0 0.0
    %565 = vmatpush2.msra.mxu0 0.0
    %566 = vmatprep.subr.mxu0 0.0
    %567 = vmatpush2.msra.mxu0 0.0
    %568 = vmatprep.subr.mxu0 0.0
    %569 = vmatpush2.msra.mxu0 0.0
    %570 = vmatprep.subr.mxu0 0.0
    %571 = vmatpush2.msra.mxu0 0.0
    %572 = vmatprep.subr.mxu0 0.0
    %573 = vmatpush2.msra.mxu0 0.0
    %574 = vmatprep.mubr.f32.mxu0 0.0
    %575 = vmatmul.mubr.f32.gmra.mxu0 %v508
    %v576 = vpop.f32.mrf.mxu0
    %v577 = vadd.f32 0.0, %v576
    %v578 = vpop.f32.mrf.mxu0
    %579 = vdwg.mxu0
    %v581 = vrot.slane %v577, 2
    %v583 = vadd.f32 %v171, %v581
    %v584 = vxor.u32 %v583, 2147483648
    %v585 = vmul.f32 %v584, 1.442695
    %v586 = vpow.pop %v585
    %v587 = vadd.f32 %v586, 1.0
    %v588 = vrcp.pop %v587
    %v589 = vmul.f32 1.0, %v588
    %v590 = vtanh.pop %v583
    %v592 = vrot.slane %v492, 6
    %v594 = vmul.f32 %v589, %v592
    %596 = vrot.lane.b32.xlu0 %v590, 64
    %v597 = vpop.permute.xlu0 %596
    %v599 = vmul.f32 %v589, %v597
    %601 = vrot.lane.b32.xlu0 %v599, 32
    %v602 = vpop.permute.xlu0 %601
    %v604 = vadd.f32 %v594, %v602
    %v605 = vtanh.pop %v604
    %607 = vrot.lane.b32.xlu0 %v605, 64
    %v608 = vpop.permute.xlu0 %607
    %v610 = vmul.f32 %v589, %v608
    %612 = vrot.lane.b32.xlu0 %v610, 32
    %v613 = vpop.permute.xlu0 %612
    %vm615 = vcmask 261126
    %616 = vst.msk [vmem:[#allocation2] sm:$0xc0] %vm615, %v613
    %v617 = vrot.slane %v610, 6
    %618 = vrot.lane.b32.xlu0 %v617, 32
    %v619 = vpop.permute.xlu0 %618
    %v620 = vsel %vm179, %v619, 0
    %622 = vmatprep.subr.mxu0 0.0
    %623 = vmatpush1.msra.mxu0 0.0
    %624 = vmatprep.subr.mxu0 0.0
    %625 = vmatpush1.msra.mxu0 0.0
    %626 = vmatprep.subr.mxu0 0.0
    %627 = vmatpush1.msra.mxu0 0.0
    %628 = vmatprep.subr.mxu0 0.0
    %629 = vmatpush1.msra.mxu0 0.0
    %630 = vmatprep.subr.mxu0 0.0
    %631 = vmatpush1.msra.mxu0 0.0
    %632 = vmatprep.subr.mxu0 0.0
    %633 = vmatpush1.msra.mxu0 0.0
    %634 = vmatprep.subr.mxu0 0.0
    %635 = vmatpush1.msra.mxu0 0.0
    %636 = vmatprep.subr.mxu0 0.0
    %637 = vmatpush1.msra.mxu0 0.0
    %638 = vmatprep.subr.mxu0 0.0
    %639 = vmatpush1.msra.mxu0 0.0
    %640 = vmatprep.subr.mxu0 0.0
    %641 = vmatpush1.msra.mxu0 0.0
    %642 = vmatprep.subr.mxu0 0.0
    %643 = vmatpush1.msra.mxu0 0.0
    %644 = vmatprep.subr.mxu0 0.0
    %645 = vmatpush1.msra.mxu0 0.0
    %646 = vmatprep.subr.mxu0 0.0
    %647 = vmatpush1.msra.mxu0 %v89
    %648 = vmatprep.subr.mxu0 0.0
    %649 = vmatpush1.msra.mxu0 %v88
    %650 = vmatprep.subr.mxu0 0.0
    %651 = vmatpush1.msra.mxu0 %v87
    %652 = vmatprep.subr.mxu0 0.0
    %653 = vmatpush1.msra.mxu0 %v86
    %654 = vmatprep.subr.mxu0 0.0
    %655 = vmatpush2.msra.mxu0 0.0
    %656 = vmatprep.subr.mxu0 0.0
    %657 = vmatpush2.msra.mxu0 0.0
    %658 = vmatprep.subr.mxu0 0.0
    %659 = vmatpush2.msra.mxu0 0.0
    %660 = vmatprep.subr.mxu0 0.0
    %661 = vmatpush2.msra.mxu0 0.0
    %662 = vmatprep.subr.mxu0 0.0
    %663 = vmatpush2.msra.mxu0 0.0
    %664 = vmatprep.subr.mxu0 0.0
    %665 = vmatpush2.msra.mxu0 0.0
    %666 = vmatprep.subr.mxu0 0.0
    %667 = vmatpush2.msra.mxu0 0.0
    %668 = vmatprep.subr.mxu0 0.0
    %669 = vmatpush2.msra.mxu0 0.0
    %670 = vmatprep.subr.mxu0 0.0
    %671 = vmatpush2.msra.mxu0 0.0
    %672 = vmatprep.subr.mxu0 0.0
    %673 = vmatpush2.msra.mxu0 0.0
    %674 = vmatprep.subr.mxu0 0.0
    %675 = vmatpush2.msra.mxu0 0.0
    %676 = vmatprep.subr.mxu0 0.0
    %677 = vmatpush2.msra.mxu0 0.0
    %678 = vmatprep.subr.mxu0 0.0
    %679 = vmatpush2.msra.mxu0 0.0
    %680 = vmatprep.subr.mxu0 0.0
    %681 = vmatpush2.msra.mxu0 0.0
    %682 = vmatprep.subr.mxu0 0.0
    %683 = vmatpush2.msra.mxu0 0.0
    %684 = vmatprep.subr.mxu0 0.0
    %685 = vmatpush2.msra.mxu0 0.0
    %686 = vmatprep.mubr.f32.mxu0 0.0
    %687 = vmatmul.mubr.f32.gmra.mxu0 %v620
    %v688 = vpop.f32.mrf.mxu0
    %v689 = vadd.f32 0.0, %v688
    %v690 = vpop.f32.mrf.mxu0
    %691 = vdwg.mxu0
    %v692 = vadd.f32 %v176, %v689
    %v693 = vxor.u32 %v692, 2147483648
    %v694 = vmul.f32 %v693, 1.442695
    %v695 = vpow.pop %v694
    %v696 = vadd.f32 %v695, 1.0
    %v697 = vrcp.pop %v696
    %v698 = vmul.f32 1.0, %v697
    %v699 = vtanh.pop %v692
    %v701 = vrot.slane %v604, 6
    %v703 = vmul.f32 %v698, %v701
    %705 = vrot.lane.b32.xlu0 %v699, 64
    %v706 = vpop.permute.xlu0 %705
    %v708 = vmul.f32 %v698, %v706
    %710 = vrot.lane.b32.xlu0 %v708, 32
    %v711 = vpop.permute.xlu0 %710
    %v713 = vadd.f32 %v703, %v711
    %v714 = vtanh.pop %v713
    %716 = vrot.lane.b32.xlu0 %v714, 64
    %v717 = vpop.permute.xlu0 %716
    %v719 = vmul.f32 %v698, %v717
    %721 = vrot.lane.b32.xlu0 %v719, 32
    %v722 = vpop.permute.xlu0 %721
    %724 = vst.msk [vmem:[#allocation2 + $0x8] sm:$0x3] %vm282, %v722
    %v725 = vsel %vm179, %v722, 0
    %727 = vmatprep.subr.mxu0 0.0
    %728 = vmatpush1.msra.mxu0 0.0
    %729 = vmatprep.subr.mxu0 0.0
    %730 = vmatpush1.msra.mxu0 0.0
    %731 = vmatprep.subr.mxu0 0.0
    %732 = vmatpush1.msra.mxu0 0.0
    %733 = vmatprep.subr.mxu0 0.0
    %734 = vmatpush1.msra.mxu0 0.0
    %735 = vmatprep.subr.mxu0 0.0
    %736 = vmatpush1.msra.mxu0 0.0
    %737 = vmatprep.subr.mxu0 0.0
    %738 = vmatpush1.msra.mxu0 0.0
    %739 = vmatprep.subr.mxu0 0.0
    %740 = vmatpush1.msra.mxu0 0.0
    %741 = vmatprep.subr.mxu0 0.0
    %742 = vmatpush1.msra.mxu0 0.0
    %743 = vmatprep.subr.mxu0 0.0
    %744 = vmatpush1.msra.mxu0 0.0
    %745 = vmatprep.subr.mxu0 0.0
    %746 = vmatpush1.msra.mxu0 0.0
    %747 = vmatprep.subr.mxu0 0.0
    %748 = vmatpush1.msra.mxu0 0.0
    %749 = vmatprep.subr.mxu0 0.0
    %750 = vmatpush1.msra.mxu0 0.0
    %751 = vmatprep.subr.mxu0 0.0
    %752 = vmatpush1.msra.mxu0 %v89
    %753 = vmatprep.subr.mxu0 0.0
    %754 = vmatpush1.msra.mxu0 %v88
    %755 = vmatprep.subr.mxu0 0.0
    %756 = vmatpush1.msra.mxu0 %v87
    %757 = vmatprep.subr.mxu0 0.0
    %758 = vmatpush1.msra.mxu0 %v86
    %759 = vmatprep.subr.mxu0 0.0
    %760 = vmatpush2.msra.mxu0 0.0
    %761 = vmatprep.subr.mxu0 0.0
    %762 = vmatpush2.msra.mxu0 0.0
    %763 = vmatprep.subr.mxu0 0.0
    %764 = vmatpush2.msra.mxu0 0.0
    %765 = vmatprep.subr.mxu0 0.0
    %766 = vmatpush2.msra.mxu0 0.0
    %767 = vmatprep.subr.mxu0 0.0
    %768 = vmatpush2.msra.mxu0 0.0
    %769 = vmatprep.subr.mxu0 0.0
    %770 = vmatpush2.msra.mxu0 0.0
    %771 = vmatprep.subr.mxu0 0.0
    %772 = vmatpush2.msra.mxu0 0.0
    %773 = vmatprep.subr.mxu0 0.0
    %774 = vmatpush2.msra.mxu0 0.0
    %775 = vmatprep.subr.mxu0 0.0
    %776 = vmatpush2.msra.mxu0 0.0
    %777 = vmatprep.subr.mxu0 0.0
    %778 = vmatpush2.msra.mxu0 0.0
    %779 = vmatprep.subr.mxu0 0.0
    %780 = vmatpush2.msra.mxu0 0.0
    %781 = vmatprep.subr.mxu0 0.0
    %782 = vmatpush2.msra.mxu0 0.0
    %783 = vmatprep.subr.mxu0 0.0
    %784 = vmatpush2.msra.mxu0 0.0
    %785 = vmatprep.subr.mxu0 0.0
    %786 = vmatpush2.msra.mxu0 0.0
    %787 = vmatprep.subr.mxu0 0.0
    %788 = vmatpush2.msra.mxu0 0.0
    %789 = vmatprep.subr.mxu0 0.0
    %790 = vmatpush2.msra.mxu0 0.0
    %791 = vmatprep.mubr.f32.mxu0 0.0
    %792 = vmatmul.mubr.f32.gmra.mxu0 %v725
    %v793 = vpop.f32.mrf.mxu0
    %v794 = vadd.f32 0.0, %v793
    %v795 = vpop.f32.mrf.mxu0
    %796 = vdwg.mxu0
    %v798 = vrot.slane %v794, 6
    %v800 = vadd.f32 %v176, %v798
    %v801 = vxor.u32 %v800, 2147483648
    %v802 = vmul.f32 %v801, 1.442695
    %v803 = vpow.pop %v802
    %v804 = vadd.f32 %v803, 1.0
    %v805 = vrcp.pop %v804
    %v806 = vmul.f32 1.0, %v805
    %v807 = vtanh.pop %v800
    %v809 = vrot.slane %v713, 6
    %v811 = vmul.f32 %v806, %v809
    %813 = vrot.lane.b32.xlu0 %v807, 64
    %v814 = vpop.permute.xlu0 %813
    %v816 = vmul.f32 %v806, %v814
    %818 = vrot.lane.b32.xlu0 %v816, 32
    %v819 = vpop.permute.xlu0 %818
    %v821 = vadd.f32 %v811, %v819
    %v822 = vtanh.pop %v821
    %824 = vrot.lane.b32.xlu0 %v822, 64
    %v825 = vpop.permute.xlu0 %824
    %v827 = vmul.f32 %v806, %v825
    %829 = vrot.lane.b32.xlu0 %v827, 32
    %v830 = vpop.permute.xlu0 %829
    %832 = vst.msk [vmem:[#allocation2 + $0x8] sm:$0xc] %vm391, %v830
    %v833 = vrot.slane %v827, 2
    %834 = vrot.lane.b32.xlu0 %v833, 32
    %v835 = vpop.permute.xlu0 %834
    %v836 = vsel %vm179, %v835, 0
    %838 = vmatprep.subr.mxu0 0.0
    %839 = vmatpush1.msra.mxu0 0.0
    %840 = vmatprep.subr.mxu0 0.0
    %841 = vmatpush1.msra.mxu0 0.0
    %842 = vmatprep.subr.mxu0 0.0
    %843 = vmatpush1.msra.mxu0 0.0
    %844 = vmatprep.subr.mxu0 0.0
    %845 = vmatpush1.msra.mxu0 0.0
    %846 = vmatprep.subr.mxu0 0.0
    %847 = vmatpush1.msra.mxu0 0.0
    %848 = vmatprep.subr.mxu0 0.0
    %849 = vmatpush1.msra.mxu0 0.0
    %850 = vmatprep.subr.mxu0 0.0
    %851 = vmatpush1.msra.mxu0 0.0
    %852 = vmatprep.subr.mxu0 0.0
    %853 = vmatpush1.msra.mxu0 0.0
    %854 = vmatprep.subr.mxu0 0.0
    %855 = vmatpush1.msra.mxu0 0.0
    %856 = vmatprep.subr.mxu0 0.0
    %857 = vmatpush1.msra.mxu0 0.0
    %858 = vmatprep.subr.mxu0 0.0
    %859 = vmatpush1.msra.mxu0 0.0
    %860 = vmatprep.subr.mxu0 0.0
    %861 = vmatpush1.msra.mxu0 0.0
    %862 = vmatprep.subr.mxu0 0.0
    %863 = vmatpush1.msra.mxu0 %v89
    %864 = vmatprep.subr.mxu0 0.0
    %865 = vmatpush1.msra.mxu0 %v88
    %866 = vmatprep.subr.mxu0 0.0
    %867 = vmatpush1.msra.mxu0 %v87
    %868 = vmatprep.subr.mxu0 0.0
    %869 = vmatpush1.msra.mxu0 %v86
    %870 = vmatprep.subr.mxu0 0.0
    %871 = vmatpush2.msra.mxu0 0.0
    %872 = vmatprep.subr.mxu0 0.0
    %873 = vmatpush2.msra.mxu0 0.0
    %874 = vmatprep.subr.mxu0 0.0
    %875 = vmatpush2.msra.mxu0 0.0
    %876 = vmatprep.subr.mxu0 0.0
    %877 = vmatpush2.msra.mxu0 0.0
    %878 = vmatprep.subr.mxu0 0.0
    %879 = vmatpush2.msra.mxu0 0.0
    %880 = vmatprep.subr.mxu0 0.0
    %881 = vmatpush2.msra.mxu0 0.0
    %882 = vmatprep.subr.mxu0 0.0
    %883 = vmatpush2.msra.mxu0 0.0
    %884 = vmatprep.subr.mxu0 0.0
    %885 = vmatpush2.msra.mxu0 0.0
    %886 = vmatprep.subr.mxu0 0.0
    %887 = vmatpush2.msra.mxu0 0.0
    %888 = vmatprep.subr.mxu0 0.0
    %889 = vmatpush2.msra.mxu0 0.0
    %890 = vmatprep.subr.mxu0 0.0
    %891 = vmatpush2.msra.mxu0 0.0
    %892 = vmatprep.subr.mxu0 0.0
    %893 = vmatpush2.msra.mxu0 0.0
    %894 = vmatprep.subr.mxu0 0.0
    %895 = vmatpush2.msra.mxu0 0.0
    %896 = vmatprep.subr.mxu0 0.0
    %897 = vmatpush2.msra.mxu0 0.0
    %898 = vmatprep.subr.mxu0 0.0
    %899 = vmatpush2.msra.mxu0 0.0
    %900 = vmatprep.subr.mxu0 0.0
    %901 = vmatpush2.msra.mxu0 0.0
    %902 = vmatprep.mubr.f32.mxu0 0.0
    %903 = vmatmul.mubr.f32.gmra.mxu0 %v836
    %v904 = vpop.f32.mrf.mxu0
    %v905 = vadd.f32 0.0, %v904
    %v906 = vpop.f32.mrf.mxu0
    %907 = vdwg.mxu0
    %v909 = vrot.slane %v905, 4
    %v911 = vadd.f32 %v176, %v909
    %v912 = vxor.u32 %v911, 2147483648
    %v913 = vmul.f32 %v912, 1.442695
    %v914 = vpow.pop %v913
    %v915 = vadd.f32 %v914, 1.0
    %v916 = vrcp.pop %v915
    %v917 = vmul.f32 1.0, %v916
    %v918 = vtanh.pop %v911
    %v920 = vrot.slane %v821, 6
    %v922 = vmul.f32 %v917, %v920
    %924 = vrot.lane.b32.xlu0 %v918, 64
    %v925 = vpop.permute.xlu0 %924
    %v927 = vmul.f32 %v917, %v925
    %929 = vrot.lane.b32.xlu0 %v927, 32
    %v930 = vpop.permute.xlu0 %929
    %v932 = vadd.f32 %v922, %v930
    %v933 = vtanh.pop %v932
    %935 = vrot.lane.b32.xlu0 %v933, 64
    %v936 = vpop.permute.xlu0 %935
    %v938 = vmul.f32 %v917, %v936
    %940 = vrot.lane.b32.xlu0 %v938, 32
    %v941 = vpop.permute.xlu0 %940
    %943 = vst.msk [vmem:[#allocation2 + $0x8] sm:$0x30] %vm503, %v941
    %v944 = vrot.slane %v938, 4
    %945 = vrot.lane.b32.xlu0 %v944, 32
    %v946 = vpop.permute.xlu0 %945
    %v947 = vsel %vm179, %v946, 0
    %949 = vmatprep.subr.mxu0 0.0
    %950 = vmatpush1.msra.mxu0 0.0
    %951 = vmatprep.subr.mxu0 0.0
    %952 = vmatpush1.msra.mxu0 0.0
    %953 = vmatprep.subr.mxu0 0.0
    %954 = vmatpush1.msra.mxu0 0.0
    %955 = vmatprep.subr.mxu0 0.0
    %956 = vmatpush1.msra.mxu0 0.0
    %957 = vmatprep.subr.mxu0 0.0
    %958 = vmatpush1.msra.mxu0 0.0
    %959 = vmatprep.subr.mxu0 0.0
    %960 = vmatpush1.msra.mxu0 0.0
    %961 = vmatprep.subr.mxu0 0.0
    %962 = vmatpush1.msra.mxu0 0.0
    %963 = vmatprep.subr.mxu0 0.0
    %964 = vmatpush1.msra.mxu0 0.0
    %965 = vmatprep.subr.mxu0 0.0
    %966 = vmatpush1.msra.mxu0 0.0
    %967 = vmatprep.subr.mxu0 0.0
    %968 = vmatpush1.msra.mxu0 0.0
    %969 = vmatprep.subr.mxu0 0.0
    %970 = vmatpush1.msra.mxu0 0.0
    %971 = vmatprep.subr.mxu0 0.0
    %972 = vmatpush1.msra.mxu0 0.0
    %973 = vmatprep.subr.mxu0 0.0
    %974 = vmatpush1.msra.mxu0 %v89
    %975 = vmatprep.subr.mxu0 0.0
    %976 = vmatpush1.msra.mxu0 %v88
    %977 = vmatprep.subr.mxu0 0.0
    %978 = vmatpush1.msra.mxu0 %v87
    %979 = vmatprep.subr.mxu0 0.0
    %980 = vmatpush1.msra.mxu0 %v86
    %981 = vmatprep.subr.mxu0 0.0
    %982 = vmatpush2.msra.mxu0 0.0
    %983 = vmatprep.subr.mxu0 0.0
    %984 = vmatpush2.msra.mxu0 0.0
    %985 = vmatprep.subr.mxu0 0.0
    %986 = vmatpush2.msra.mxu0 0.0
    %987 = vmatprep.subr.mxu0 0.0
    %988 = vmatpush2.msra.mxu0 0.0
    %989 = vmatprep.subr.mxu0 0.0
    %990 = vmatpush2.msra.mxu0 0.0
    %991 = vmatprep.subr.mxu0 0.0
    %992 = vmatpush2.msra.mxu0 0.0
    %993 = vmatprep.subr.mxu0 0.0
    %994 = vmatpush2.msra.mxu0 0.0
    %995 = vmatprep.subr.mxu0 0.0
    %996 = vmatpush2.msra.mxu0 0.0
    %997 = vmatprep.subr.mxu0 0.0
    %998 = vmatpush2.msra.mxu0 0.0
    %999 = vmatprep.subr.mxu0 0.0
    %1000 = vmatpush2.msra.mxu0 0.0
    %1001 = vmatprep.subr.mxu0 0.0
    %1002 = vmatpush2.msra.mxu0 0.0
    %1003 = vmatprep.subr.mxu0 0.0
    %1004 = vmatpush2.msra.mxu0 0.0
    %1005 = vmatprep.subr.mxu0 0.0
    %1006 = vmatpush2.msra.mxu0 0.0
    %1007 = vmatprep.subr.mxu0 0.0
    %1008 = vmatpush2.msra.mxu0 0.0
    %1009 = vmatprep.subr.mxu0 0.0
    %1010 = vmatpush2.msra.mxu0 0.0
    %1011 = vmatprep.subr.mxu0 0.0
    %1012 = vmatpush2.msra.mxu0 0.0
    %1013 = vmatprep.mubr.f32.mxu0 0.0
    %1014 = vmatmul.mubr.f32.gmra.mxu0 %v947
    %v1015 = vpop.f32.mrf.mxu0
    %v1016 = vadd.f32 0.0, %v1015
    %v1017 = vpop.f32.mrf.mxu0
    %1018 = vdwg.mxu0
    %v1020 = vrot.slane %v1016, 2
    %v1022 = vadd.f32 %v176, %v1020
    %v1023 = vxor.u32 %v1022, 2147483648
    %v1024 = vmul.f32 %v1023, 1.442695
    %v1025 = vpow.pop %v1024
    %v1026 = vadd.f32 %v1025, 1.0
    %v1027 = vrcp.pop %v1026
    %v1028 = vmul.f32 1.0, %v1027
    %v1029 = vtanh.pop %v1022
    %v1031 = vrot.slane %v932, 6
    %v1033 = vmul.f32 %v1028, %v1031
    %1035 = vrot.lane.b32.xlu0 %v1029, 64
    %v1036 = vpop.permute.xlu0 %1035
    %v1038 = vmul.f32 %v1028, %v1036
    %1040 = vrot.lane.b32.xlu0 %v1038, 32
    %v1041 = vpop.permute.xlu0 %1040
    %v1043 = vadd.f32 %v1033, %v1041
    %v1044 = vtanh.pop %v1043
    %1046 = vrot.lane.b32.xlu0 %v1044, 64
    %v1047 = vpop.permute.xlu0 %1046
    %v1049 = vmul.f32 %v1028, %v1047
    %1051 = vrot.lane.b32.xlu0 %v1049, 32
    %v1052 = vpop.permute.xlu0 %1051
    %1054 = vst.msk [vmem:[#allocation2 + $0x8] sm:$0xc0] %vm615, %v1052
    %v1055 = vld [vmem:[#allocation2] sm:$0xff]
    %v1056 = vld [vmem:[#allocation2 + $0x8] sm:$0xff]
    %v1057 = vld [vmem:[%s4] sm:$0xff]
    %v1058 = vld [vmem:[%s4 + $0x8] sm:$0xff]
    %v1059 = vld [vmem:[%s4 + $0x10] sm:$0xff]
    %v1060 = vld [vmem:[%s4 + $0x18] sm:$0xff]
    %v1061 = vld [vmem:[#allocation6] sm:$0xff]
    %v1062 = vld [vmem:[#allocation6 + $0x8] sm:$0xff]
    %v1063 = vld [vmem:[#allocation6 + $0x10] sm:$0xff]
    %v1064 = vld [vmem:[#allocation6 + $0x18] sm:$0xff]
    %v1065 = vld [vmem:[#allocation8] sm:$0x1]
    %v1067 = vlaneseq
    %v1068 = vshrl.u32 %v1067, 7
    %v1069 = vsub.s32 0, %v1068
    %v1070 = vrot.slane %v1065, %v1069
    %v1073 = vsel %vm179, %v1055, 0
    %v1076 = vsel %vm179, %v1056, 0
    %1078 = vmatprep.subr.mxu0 0.0
    %1079 = vmatpush1.msra.mxu0 0.0
    %1080 = vmatprep.subr.mxu0 0.0
    %1081 = vmatpush1.msra.mxu0 0.0
    %1082 = vmatprep.subr.mxu0 0.0
    %1083 = vmatpush1.msra.mxu0 0.0
    %1084 = vmatprep.subr.mxu0 0.0
    %1085 = vmatpush1.msra.mxu0 0.0
    %1086 = vmatprep.subr.mxu0 0.0
    %1087 = vmatpush1.msra.mxu0 0.0
    %1088 = vmatprep.subr.mxu0 0.0
    %1089 = vmatpush1.msra.mxu0 0.0
    %1090 = vmatprep.subr.mxu0 0.0
    %1091 = vmatpush1.msra.mxu0 0.0
    %1092 = vmatprep.subr.mxu0 0.0
    %1093 = vmatpush1.msra.mxu0 0.0
    %1094 = vmatprep.subr.mxu0 0.0
    %1095 = vmatpush1.msra.mxu0 0.0
    %1096 = vmatprep.subr.mxu0 0.0
    %1097 = vmatpush1.msra.mxu0 0.0
    %1098 = vmatprep.subr.mxu0 0.0
    %1099 = vmatpush1.msra.mxu0 0.0
    %1100 = vmatprep.subr.mxu0 0.0
    %1101 = vmatpush1.msra.mxu0 0.0
    %1102 = vmatprep.subr.mxu0 0.0
    %1103 = vmatpush1.msra.mxu0 %v1060
    %1104 = vmatprep.subr.mxu0 0.0
    %1105 = vmatpush1.msra.mxu0 %v1059
    %1106 = vmatprep.subr.mxu0 0.0
    %1107 = vmatpush1.msra.mxu0 %v1058
    %1108 = vmatprep.subr.mxu0 0.0
    %1109 = vmatpush1.msra.mxu0 %v1057
    %1110 = vmatprep.subr.mxu0 0.0
    %1111 = vmatpush2.msra.mxu0 0.0
    %1112 = vmatprep.subr.mxu0 0.0
    %1113 = vmatpush2.msra.mxu0 0.0
    %1114 = vmatprep.subr.mxu0 0.0
    %1115 = vmatpush2.msra.mxu0 0.0
    %1116 = vmatprep.subr.mxu0 0.0
    %1117 = vmatpush2.msra.mxu0 0.0
    %1118 = vmatprep.subr.mxu0 0.0
    %1119 = vmatpush2.msra.mxu0 0.0
    %1120 = vmatprep.subr.mxu0 0.0
    %1121 = vmatpush2.msra.mxu0 0.0
    %1122 = vmatprep.subr.mxu0 0.0
    %1123 = vmatpush2.msra.mxu0 0.0
    %1124 = vmatprep.subr.mxu0 0.0
    %1125 = vmatpush2.msra.mxu0 0.0
    %1126 = vmatprep.subr.mxu0 0.0
    %1127 = vmatpush2.msra.mxu0 0.0
    %1128 = vmatprep.subr.mxu0 0.0
    %1129 = vmatpush2.msra.mxu0 0.0
    %1130 = vmatprep.subr.mxu0 0.0
    %1131 = vmatpush2.msra.mxu0 0.0
    %1132 = vmatprep.subr.mxu0 0.0
    %1133 = vmatpush2.msra.mxu0 0.0
    %1134 = vmatprep.subr.mxu0 0.0
    %1135 = vmatpush2.msra.mxu0 0.0
    %1136 = vmatprep.subr.mxu0 0.0
    %1137 = vmatpush2.msra.mxu0 0.0
    %1138 = vmatprep.subr.mxu0 0.0
    %1139 = vmatpush2.msra.mxu0 0.0
    %1140 = vmatprep.subr.mxu0 0.0
    %1141 = vmatpush2.msra.mxu0 0.0
    %1142 = vmatprep.mubr.f32.mxu0 0.0
    %1143 = vmatmul.mubr.f32.gmra.mxu0 %v1073
    %v1144 = vpop.f32.mrf.mxu0
    %v1145 = vadd.f32 %v1070, %v1144
    %v1146 = vpop.f32.mrf.mxu0
    %1147 = vmatprep.mubr.f32.mxu0 0.0
    %1148 = vmatmul.mubr.f32.gmra.mxu0 %v1076
    %v1149 = vpop.f32.mrf.mxu0
    %v1150 = vadd.f32 %v1070, %v1149
    %v1151 = vpop.f32.mrf.mxu0
    %1152 = vdwg.mxu0
    %1153 = vmatprep.subr.mxu0 0.0
    %1154 = vmatpush1.msra.mxu0 0.0
    %1155 = vmatprep.subr.mxu0 0.0
    %1156 = vmatpush1.msra.mxu0 0.0
    %1157 = vmatprep.subr.mxu0 0.0
    %1158 = vmatpush1.msra.mxu0 0.0
    %1159 = vmatprep.subr.mxu0 0.0
    %1160 = vmatpush1.msra.mxu0 0.0
    %1161 = vmatprep.subr.mxu0 0.0
    %1162 = vmatpush1.msra.mxu0 0.0
    %1163 = vmatprep.subr.mxu0 0.0
    %1164 = vmatpush1.msra.mxu0 0.0
    %1165 = vmatprep.subr.mxu0 0.0
    %1166 = vmatpush1.msra.mxu0 0.0
    %1167 = vmatprep.subr.mxu0 0.0
    %1168 = vmatpush1.msra.mxu0 0.0
    %1169 = vmatprep.subr.mxu0 0.0
    %1170 = vmatpush1.msra.mxu0 0.0
    %1171 = vmatprep.subr.mxu0 0.0
    %1172 = vmatpush1.msra.mxu0 0.0
    %1173 = vmatprep.subr.mxu0 0.0
    %1174 = vmatpush1.msra.mxu0 0.0
    %1175 = vmatprep.subr.mxu0 0.0
    %1176 = vmatpush1.msra.mxu0 0.0
    %1177 = vmatprep.subr.mxu0 0.0
    %1178 = vmatpush1.msra.mxu0 %v1064
    %1179 = vmatprep.subr.mxu0 0.0
    %1180 = vmatpush1.msra.mxu0 %v1063
    %1181 = vmatprep.subr.mxu0 0.0
    %1182 = vmatpush1.msra.mxu0 %v1062
    %1183 = vmatprep.subr.mxu0 0.0
    %1184 = vmatpush1.msra.mxu0 %v1061
    %1185 = vmatprep.subr.mxu0 0.0
    %1186 = vmatpush2.msra.mxu0 0.0
    %1187 = vmatprep.subr.mxu0 0.0
    %1188 = vmatpush2.msra.mxu0 0.0
    %1189 = vmatprep.subr.mxu0 0.0
    %1190 = vmatpush2.msra.mxu0 0.0
    %1191 = vmatprep.subr.mxu0 0.0
    %1192 = vmatpush2.msra.mxu0 0.0
    %1193 = vmatprep.subr.mxu0 0.0
    %1194 = vmatpush2.msra.mxu0 0.0
    %1195 = vmatprep.subr.mxu0 0.0
    %1196 = vmatpush2.msra.mxu0 0.0
    %1197 = vmatprep.subr.mxu0 0.0
    %1198 = vmatpush2.msra.mxu0 0.0
    %1199 = vmatprep.subr.mxu0 0.0
    %1200 = vmatpush2.msra.mxu0 0.0
    %1201 = vmatprep.subr.mxu0 0.0
    %1202 = vmatpush2.msra.mxu0 0.0
    %1203 = vmatprep.subr.mxu0 0.0
    %1204 = vmatpush2.msra.mxu0 0.0
    %1205 = vmatprep.subr.mxu0 0.0
    %1206 = vmatpush2.msra.mxu0 0.0
    %1207 = vmatprep.subr.mxu0 0.0
    %1208 = vmatpush2.msra.mxu0 0.0
    %1209 = vmatprep.subr.mxu0 0.0
    %1210 = vmatpush2.msra.mxu0 0.0
    %1211 = vmatprep.subr.mxu0 0.0
    %1212 = vmatpush2.msra.mxu0 0.0
    %1213 = vmatprep.subr.mxu0 0.0
    %1214 = vmatpush2.msra.mxu0 0.0
    %1215 = vmatprep.subr.mxu0 0.0
    %1216 = vmatpush2.msra.mxu0 0.0
    %1217 = vmatprep.mubr.f32.mxu0 0.0
    %1218 = vmatmul.mubr.f32.gmra.mxu0 %v181
    %v1219 = vpop.f32.mrf.mxu0
    %v1220 = vadd.f32 0.0, %v1219
    %v1221 = vpop.f32.mrf.mxu0
    %1222 = vdwg.mxu0
    %v1223 = vadd.f32 %v1145, %v1220
    %v1224 = vxor.u32 %v1223, 2147483648
    %v1225 = vmul.f32 %v1224, 1.442695
    %v1226 = vpow.pop %v1225
    %v1227 = vadd.f32 %v1226, 1.0
    %v1228 = vrcp.pop %v1227
    %v1229 = vmul.f32 1.0, %v1228
    %v1230 = vtanh.pop %v1223
    %v1231 = vmul.f32 %v1229, 0.0
    %1233 = vrot.lane.b32.xlu0 %v1230, 64
    %v1234 = vpop.permute.xlu0 %1233
    %v1236 = vmul.f32 %v1229, %v1234
    %1238 = vrot.lane.b32.xlu0 %v1236, 32
    %v1239 = vpop.permute.xlu0 %1238
    %v1241 = vadd.f32 %v1231, %v1239
    %v1242 = vtanh.pop %v1241
    %1244 = vrot.lane.b32.xlu0 %v1242, 64
    %v1245 = vpop.permute.xlu0 %1244
    %v1247 = vmul.f32 %v1229, %v1245
    %1249 = vrot.lane.b32.xlu0 %v1247, 32
    %v1250 = vpop.permute.xlu0 %1249
    %v1251 = vsel %vm179, %v1250, 0
    %1253 = vmatprep.subr.mxu0 0.0
    %1254 = vmatpush1.msra.mxu0 0.0
    %1255 = vmatprep.subr.mxu0 0.0
    %1256 = vmatpush1.msra.mxu0 0.0
    %1257 = vmatprep.subr.mxu0 0.0
    %1258 = vmatpush1.msra.mxu0 0.0
    %1259 = vmatprep.subr.mxu0 0.0
    %1260 = vmatpush1.msra.mxu0 0.0
    %1261 = vmatprep.subr.mxu0 0.0
    %1262 = vmatpush1.msra.mxu0 0.0
    %1263 = vmatprep.subr.mxu0 0.0
    %1264 = vmatpush1.msra.mxu0 0.0
    %1265 = vmatprep.subr.mxu0 0.0
    %1266 = vmatpush1.msra.mxu0 0.0
    %1267 = vmatprep.subr.mxu0 0.0
    %1268 = vmatpush1.msra.mxu0 0.0
    %1269 = vmatprep.subr.mxu0 0.0
    %1270 = vmatpush1.msra.mxu0 0.0
    %1271 = vmatprep.subr.mxu0 0.0
    %1272 = vmatpush1.msra.mxu0 0.0
    %1273 = vmatprep.subr.mxu0 0.0
    %1274 = vmatpush1.msra.mxu0 0.0
    %1275 = vmatprep.subr.mxu0 0.0
    %1276 = vmatpush1.msra.mxu0 0.0
    %1277 = vmatprep.subr.mxu0 0.0
    %1278 = vmatpush1.msra.mxu0 %v1064
    %1279 = vmatprep.subr.mxu0 0.0
    %1280 = vmatpush1.msra.mxu0 %v1063
    %1281 = vmatprep.subr.mxu0 0.0
    %1282 = vmatpush1.msra.mxu0 %v1062
    %1283 = vmatprep.subr.mxu0 0.0
    %1284 = vmatpush1.msra.mxu0 %v1061
    %1285 = vmatprep.subr.mxu0 0.0
    %1286 = vmatpush2.msra.mxu0 0.0
    %1287 = vmatprep.subr.mxu0 0.0
    %1288 = vmatpush2.msra.mxu0 0.0
    %1289 = vmatprep.subr.mxu0 0.0
    %1290 = vmatpush2.msra.mxu0 0.0
    %1291 = vmatprep.subr.mxu0 0.0
    %1292 = vmatpush2.msra.mxu0 0.0
    %1293 = vmatprep.subr.mxu0 0.0
    %1294 = vmatpush2.msra.mxu0 0.0
    %1295 = vmatprep.subr.mxu0 0.0
    %1296 = vmatpush2.msra.mxu0 0.0
    %1297 = vmatprep.subr.mxu0 0.0
    %1298 = vmatpush2.msra.mxu0 0.0
    %1299 = vmatprep.subr.mxu0 0.0
    %1300 = vmatpush2.msra.mxu0 0.0
    %1301 = vmatprep.subr.mxu0 0.0
    %1302 = vmatpush2.msra.mxu0 0.0
    %1303 = vmatprep.subr.mxu0 0.0
    %1304 = vmatpush2.msra.mxu0 0.0
    %1305 = vmatprep.subr.mxu0 0.0
    %1306 = vmatpush2.msra.mxu0 0.0
    %1307 = vmatprep.subr.mxu0 0.0
    %1308 = vmatpush2.msra.mxu0 0.0
    %1309 = vmatprep.subr.mxu0 0.0
    %1310 = vmatpush2.msra.mxu0 0.0
    %1311 = vmatprep.subr.mxu0 0.0
    %1312 = vmatpush2.msra.mxu0 0.0
    %1313 = vmatprep.subr.mxu0 0.0
    %1314 = vmatpush2.msra.mxu0 0.0
    %1315 = vmatprep.subr.mxu0 0.0
    %1316 = vmatpush2.msra.mxu0 0.0
    %1317 = vmatprep.mubr.f32.mxu0 0.0
    %1318 = vmatmul.mubr.f32.gmra.mxu0 %v1251
    %v1319 = vpop.f32.mrf.mxu0
    %v1320 = vadd.f32 0.0, %v1319
    %v1321 = vpop.f32.mrf.mxu0
    %1322 = vdwg.mxu0
    %v1324 = vrot.slane %v1320, 6
    %v1326 = vadd.f32 %v1145, %v1324
    %v1327 = vxor.u32 %v1326, 2147483648
    %v1328 = vmul.f32 %v1327, 1.442695
    %v1329 = vpow.pop %v1328
    %v1330 = vadd.f32 %v1329, 1.0
    %v1331 = vrcp.pop %v1330
    %v1332 = vmul.f32 1.0, %v1331
    %v1333 = vtanh.pop %v1326
    %v1335 = vrot.slane %v1241, 6
    %v1337 = vmul.f32 %v1332, %v1335
    %1339 = vrot.lane.b32.xlu0 %v1333, 64
    %v1340 = vpop.permute.xlu0 %1339
    %v1342 = vmul.f32 %v1332, %v1340
    %1344 = vrot.lane.b32.xlu0 %v1342, 32
    %v1345 = vpop.permute.xlu0 %1344
    %v1347 = vadd.f32 %v1337, %v1345
    %v1348 = vtanh.pop %v1347
    %1350 = vrot.lane.b32.xlu0 %v1348, 64
    %v1351 = vpop.permute.xlu0 %1350
    %v1353 = vmul.f32 %v1332, %v1351
    %v1355 = vrot.slane %v1353, 2
    %1356 = vrot.lane.b32.xlu0 %v1355, 32
    %v1357 = vpop.permute.xlu0 %1356
    %v1358 = vsel %vm179, %v1357, 0
    %1360 = vmatprep.subr.mxu0 0.0
    %1361 = vmatpush1.msra.mxu0 0.0
    %1362 = vmatprep.subr.mxu0 0.0
    %1363 = vmatpush1.msra.mxu0 0.0
    %1364 = vmatprep.subr.mxu0 0.0
    %1365 = vmatpush1.msra.mxu0 0.0
    %1366 = vmatprep.subr.mxu0 0.0
    %1367 = vmatpush1.msra.mxu0 0.0
    %1368 = vmatprep.subr.mxu0 0.0
    %1369 = vmatpush1.msra.mxu0 0.0
    %1370 = vmatprep.subr.mxu0 0.0
    %1371 = vmatpush1.msra.mxu0 0.0
    %1372 = vmatprep.subr.mxu0 0.0
    %1373 = vmatpush1.msra.mxu0 0.0
    %1374 = vmatprep.subr.mxu0 0.0
    %1375 = vmatpush1.msra.mxu0 0.0
    %1376 = vmatprep.subr.mxu0 0.0
    %1377 = vmatpush1.msra.mxu0 0.0
    %1378 = vmatprep.subr.mxu0 0.0
    %1379 = vmatpush1.msra.mxu0 0.0
    %1380 = vmatprep.subr.mxu0 0.0
    %1381 = vmatpush1.msra.mxu0 0.0
    %1382 = vmatprep.subr.mxu0 0.0
    %1383 = vmatpush1.msra.mxu0 0.0
    %1384 = vmatprep.subr.mxu0 0.0
    %1385 = vmatpush1.msra.mxu0 %v1064
    %1386 = vmatprep.subr.mxu0 0.0
    %1387 = vmatpush1.msra.mxu0 %v1063
    %1388 = vmatprep.subr.mxu0 0.0
    %1389 = vmatpush1.msra.mxu0 %v1062
    %1390 = vmatprep.subr.mxu0 0.0
    %1391 = vmatpush1.msra.mxu0 %v1061
    %1392 = vmatprep.subr.mxu0 0.0
    %1393 = vmatpush2.msra.mxu0 0.0
    %1394 = vmatprep.subr.mxu0 0.0
    %1395 = vmatpush2.msra.mxu0 0.0
    %1396 = vmatprep.subr.mxu0 0.0
    %1397 = vmatpush2.msra.mxu0 0.0
    %1398 = vmatprep.subr.mxu0 0.0
    %1399 = vmatpush2.msra.mxu0 0.0
    %1400 = vmatprep.subr.mxu0 0.0
    %1401 = vmatpush2.msra.mxu0 0.0
    %1402 = vmatprep.subr.mxu0 0.0
    %1403 = vmatpush2.msra.mxu0 0.0
    %1404 = vmatprep.subr.mxu0 0.0
    %1405 = vmatpush2.msra.mxu0 0.0
    %1406 = vmatprep.subr.mxu0 0.0
    %1407 = vmatpush2.msra.mxu0 0.0
    %1408 = vmatprep.subr.mxu0 0.0
    %1409 = vmatpush2.msra.mxu0 0.0
    %1410 = vmatprep.subr.mxu0 0.0
    %1411 = vmatpush2.msra.mxu0 0.0
    %1412 = vmatprep.subr.mxu0 0.0
    %1413 = vmatpush2.msra.mxu0 0.0
    %1414 = vmatprep.subr.mxu0 0.0
    %1415 = vmatpush2.msra.mxu0 0.0
    %1416 = vmatprep.subr.mxu0 0.0
    %1417 = vmatpush2.msra.mxu0 0.0
    %1418 = vmatprep.subr.mxu0 0.0
    %1419 = vmatpush2.msra.mxu0 0.0
    %1420 = vmatprep.subr.mxu0 0.0
    %1421 = vmatpush2.msra.mxu0 0.0
    %1422 = vmatprep.subr.mxu0 0.0
    %1423 = vmatpush2.msra.mxu0 0.0
    %1424 = vmatprep.mubr.f32.mxu0 0.0
    %1425 = vmatmul.mubr.f32.gmra.mxu0 %v1358
    %v1426 = vpop.f32.mrf.mxu0
    %v1427 = vadd.f32 0.0, %v1426
    %v1428 = vpop.f32.mrf.mxu0
    %1429 = vdwg.mxu0
    %v1431 = vrot.slane %v1427, 4
    %v1433 = vadd.f32 %v1145, %v1431
    %v1434 = vxor.u32 %v1433, 2147483648
    %v1435 = vmul.f32 %v1434, 1.442695
    %v1436 = vpow.pop %v1435
    %v1437 = vadd.f32 %v1436, 1.0
    %v1438 = vrcp.pop %v1437
    %v1439 = vmul.f32 1.0, %v1438
    %v1440 = vtanh.pop %v1433
    %v1442 = vrot.slane %v1347, 6
    %v1444 = vmul.f32 %v1439, %v1442
    %1446 = vrot.lane.b32.xlu0 %v1440, 64
    %v1447 = vpop.permute.xlu0 %1446
    %v1449 = vmul.f32 %v1439, %v1447
    %1451 = vrot.lane.b32.xlu0 %v1449, 32
    %v1452 = vpop.permute.xlu0 %1451
    %v1454 = vadd.f32 %v1444, %v1452
    %v1455 = vtanh.pop %v1454
    %1457 = vrot.lane.b32.xlu0 %v1455, 64
    %v1458 = vpop.permute.xlu0 %1457
    %v1460 = vmul.f32 %v1439, %v1458
    %v1462 = vrot.slane %v1460, 4
    %1463 = vrot.lane.b32.xlu0 %v1462, 32
    %v1464 = vpop.permute.xlu0 %1463
    %v1465 = vsel %vm179, %v1464, 0
    %1467 = vmatprep.subr.mxu0 0.0
    %1468 = vmatpush1.msra.mxu0 0.0
    %1469 = vmatprep.subr.mxu0 0.0
    %1470 = vmatpush1.msra.mxu0 0.0
    %1471 = vmatprep.subr.mxu0 0.0
    %1472 = vmatpush1.msra.mxu0 0.0
    %1473 = vmatprep.subr.mxu0 0.0
    %1474 = vmatpush1.msra.mxu0 0.0
    %1475 = vmatprep.subr.mxu0 0.0
    %1476 = vmatpush1.msra.mxu0 0.0
    %1477 = vmatprep.subr.mxu0 0.0
    %1478 = vmatpush1.msra.mxu0 0.0
    %1479 = vmatprep.subr.mxu0 0.0
    %1480 = vmatpush1.msra.mxu0 0.0
    %1481 = vmatprep.subr.mxu0 0.0
    %1482 = vmatpush1.msra.mxu0 0.0
    %1483 = vmatprep.subr.mxu0 0.0
    %1484 = vmatpush1.msra.mxu0 0.0
    %1485 = vmatprep.subr.mxu0 0.0
    %1486 = vmatpush1.msra.mxu0 0.0
    %1487 = vmatprep.subr.mxu0 0.0
    %1488 = vmatpush1.msra.mxu0 0.0
    %1489 = vmatprep.subr.mxu0 0.0
    %1490 = vmatpush1.msra.mxu0 0.0
    %1491 = vmatprep.subr.mxu0 0.0
    %1492 = vmatpush1.msra.mxu0 %v1064
    %1493 = vmatprep.subr.mxu0 0.0
    %1494 = vmatpush1.msra.mxu0 %v1063
    %1495 = vmatprep.subr.mxu0 0.0
    %1496 = vmatpush1.msra.mxu0 %v1062
    %1497 = vmatprep.subr.mxu0 0.0
    %1498 = vmatpush1.msra.mxu0 %v1061
    %1499 = vmatprep.subr.mxu0 0.0
    %1500 = vmatpush2.msra.mxu0 0.0
    %1501 = vmatprep.subr.mxu0 0.0
    %1502 = vmatpush2.msra.mxu0 0.0
    %1503 = vmatprep.subr.mxu0 0.0
    %1504 = vmatpush2.msra.mxu0 0.0
    %1505 = vmatprep.subr.mxu0 0.0
    %1506 = vmatpush2.msra.mxu0 0.0
    %1507 = vmatprep.subr.mxu0 0.0
    %1508 = vmatpush2.msra.mxu0 0.0
    %1509 = vmatprep.subr.mxu0 0.0
    %1510 = vmatpush2.msra.mxu0 0.0
    %1511 = vmatprep.subr.mxu0 0.0
    %1512 = vmatpush2.msra.mxu0 0.0
    %1513 = vmatprep.subr.mxu0 0.0
    %1514 = vmatpush2.msra.mxu0 0.0
    %1515 = vmatprep.subr.mxu0 0.0
    %1516 = vmatpush2.msra.mxu0 0.0
    %1517 = vmatprep.subr.mxu0 0.0
    %1518 = vmatpush2.msra.mxu0 0.0
    %1519 = vmatprep.subr.mxu0 0.0
    %1520 = vmatpush2.msra.mxu0 0.0
    %1521 = vmatprep.subr.mxu0 0.0
    %1522 = vmatpush2.msra.mxu0 0.0
    %1523 = vmatprep.subr.mxu0 0.0
    %1524 = vmatpush2.msra.mxu0 0.0
    %1525 = vmatprep.subr.mxu0 0.0
    %1526 = vmatpush2.msra.mxu0 0.0
    %1527 = vmatprep.subr.mxu0 0.0
    %1528 = vmatpush2.msra.mxu0 0.0
    %1529 = vmatprep.subr.mxu0 0.0
    %1530 = vmatpush2.msra.mxu0 0.0
    %1531 = vmatprep.mubr.f32.mxu0 0.0
    %1532 = vmatmul.mubr.f32.gmra.mxu0 %v1465
    %v1533 = vpop.f32.mrf.mxu0
    %v1534 = vadd.f32 0.0, %v1533
    %v1535 = vpop.f32.mrf.mxu0
    %1536 = vdwg.mxu0
    %v1538 = vrot.slane %v1534, 2
    %v1540 = vadd.f32 %v1145, %v1538
    %v1541 = vxor.u32 %v1540, 2147483648
    %v1542 = vmul.f32 %v1541, 1.442695
    %v1543 = vpow.pop %v1542
    %v1544 = vadd.f32 %v1543, 1.0
    %v1545 = vrcp.pop %v1544
    %v1546 = vmul.f32 1.0, %v1545
    %v1547 = vtanh.pop %v1540
    %v1549 = vrot.slane %v1454, 6
    %v1551 = vmul.f32 %v1546, %v1549
    %1553 = vrot.lane.b32.xlu0 %v1547, 64
    %v1554 = vpop.permute.xlu0 %1553
    %v1556 = vmul.f32 %v1546, %v1554
    %1558 = vrot.lane.b32.xlu0 %v1556, 32
    %v1559 = vpop.permute.xlu0 %1558
    %v1561 = vadd.f32 %v1551, %v1559
    %v1562 = vtanh.pop %v1561
    %1564 = vrot.lane.b32.xlu0 %v1562, 64
    %v1565 = vpop.permute.xlu0 %1564
    %v1567 = vmul.f32 %v1546, %v1565
    %v1569 = vrot.slane %v1567, 6
    %1570 = vrot.lane.b32.xlu0 %v1569, 32
    %v1571 = vpop.permute.xlu0 %1570
    %v1572 = vsel %vm179, %v1571, 0
    %1574 = vmatprep.subr.mxu0 0.0
    %1575 = vmatpush1.msra.mxu0 0.0
    %1576 = vmatprep.subr.mxu0 0.0
    %1577 = vmatpush1.msra.mxu0 0.0
    %1578 = vmatprep.subr.mxu0 0.0
    %1579 = vmatpush1.msra.mxu0 0.0
    %1580 = vmatprep.subr.mxu0 0.0
    %1581 = vmatpush1.msra.mxu0 0.0
    %1582 = vmatprep.subr.mxu0 0.0
    %1583 = vmatpush1.msra.mxu0 0.0
    %1584 = vmatprep.subr.mxu0 0.0
    %1585 = vmatpush1.msra.mxu0 0.0
    %1586 = vmatprep.subr.mxu0 0.0
    %1587 = vmatpush1.msra.mxu0 0.0
    %1588 = vmatprep.subr.mxu0 0.0
    %1589 = vmatpush1.msra.mxu0 0.0
    %1590 = vmatprep.subr.mxu0 0.0
    %1591 = vmatpush1.msra.mxu0 0.0
    %1592 = vmatprep.subr.mxu0 0.0
    %1593 = vmatpush1.msra.mxu0 0.0
    %1594 = vmatprep.subr.mxu0 0.0
    %1595 = vmatpush1.msra.mxu0 0.0
    %1596 = vmatprep.subr.mxu0 0.0
    %1597 = vmatpush1.msra.mxu0 0.0
    %1598 = vmatprep.subr.mxu0 0.0
    %1599 = vmatpush1.msra.mxu0 %v1064
    %1600 = vmatprep.subr.mxu0 0.0
    %1601 = vmatpush1.msra.mxu0 %v1063
    %1602 = vmatprep.subr.mxu0 0.0
    %1603 = vmatpush1.msra.mxu0 %v1062
    %1604 = vmatprep.subr.mxu0 0.0
    %1605 = vmatpush1.msra.mxu0 %v1061
    %1606 = vmatprep.subr.mxu0 0.0
    %1607 = vmatpush2.msra.mxu0 0.0
    %1608 = vmatprep.subr.mxu0 0.0
    %1609 = vmatpush2.msra.mxu0 0.0
    %1610 = vmatprep.subr.mxu0 0.0
    %1611 = vmatpush2.msra.mxu0 0.0
    %1612 = vmatprep.subr.mxu0 0.0
    %1613 = vmatpush2.msra.mxu0 0.0
    %1614 = vmatprep.subr.mxu0 0.0
    %1615 = vmatpush2.msra.mxu0 0.0
    %1616 = vmatprep.subr.mxu0 0.0
    %1617 = vmatpush2.msra.mxu0 0.0
    %1618 = vmatprep.subr.mxu0 0.0
    %1619 = vmatpush2.msra.mxu0 0.0
    %1620 = vmatprep.subr.mxu0 0.0
    %1621 = vmatpush2.msra.mxu0 0.0
    %1622 = vmatprep.subr.mxu0 0.0
    %1623 = vmatpush2.msra.mxu0 0.0
    %1624 = vmatprep.subr.mxu0 0.0
    %1625 = vmatpush2.msra.mxu0 0.0
    %1626 = vmatprep.subr.mxu0 0.0
    %1627 = vmatpush2.msra.mxu0 0.0
    %1628 = vmatprep.subr.mxu0 0.0
    %1629 = vmatpush2.msra.mxu0 0.0
    %1630 = vmatprep.subr.mxu0 0.0
    %1631 = vmatpush2.msra.mxu0 0.0
    %1632 = vmatprep.subr.mxu0 0.0
    %1633 = vmatpush2.msra.mxu0 0.0
    %1634 = vmatprep.subr.mxu0 0.0
    %1635 = vmatpush2.msra.mxu0 0.0
    %1636 = vmatprep.subr.mxu0 0.0
    %1637 = vmatpush2.msra.mxu0 0.0
    %1638 = vmatprep.mubr.f32.mxu0 0.0
    %1639 = vmatmul.mubr.f32.gmra.mxu0 %v1572
    %v1640 = vpop.f32.mrf.mxu0
    %v1641 = vadd.f32 0.0, %v1640
    %v1642 = vpop.f32.mrf.mxu0
    %1643 = vdwg.mxu0
    %v1644 = vadd.f32 %v1150, %v1641
    %v1645 = vxor.u32 %v1644, 2147483648
    %v1646 = vmul.f32 %v1645, 1.442695
    %v1647 = vpow.pop %v1646
    %v1648 = vadd.f32 %v1647, 1.0
    %v1649 = vrcp.pop %v1648
    %v1650 = vmul.f32 1.0, %v1649
    %v1651 = vtanh.pop %v1644
    %v1653 = vrot.slane %v1561, 6
    %v1655 = vmul.f32 %v1650, %v1653
    %1657 = vrot.lane.b32.xlu0 %v1651, 64
    %v1658 = vpop.permute.xlu0 %1657
    %v1660 = vmul.f32 %v1650, %v1658
    %1662 = vrot.lane.b32.xlu0 %v1660, 32
    %v1663 = vpop.permute.xlu0 %1662
    %v1665 = vadd.f32 %v1655, %v1663
    %v1666 = vtanh.pop %v1665
    %1668 = vrot.lane.b32.xlu0 %v1666, 64
    %v1669 = vpop.permute.xlu0 %1668
    %v1671 = vmul.f32 %v1650, %v1669
    %1673 = vrot.lane.b32.xlu0 %v1671, 32
    %v1674 = vpop.permute.xlu0 %1673
    %v1675 = vsel %vm179, %v1674, 0
    %1677 = vmatprep.subr.mxu0 0.0
    %1678 = vmatpush1.msra.mxu0 0.0
    %1679 = vmatprep.subr.mxu0 0.0
    %1680 = vmatpush1.msra.mxu0 0.0
    %1681 = vmatprep.subr.mxu0 0.0
    %1682 = vmatpush1.msra.mxu0 0.0
    %1683 = vmatprep.subr.mxu0 0.0
    %1684 = vmatpush1.msra.mxu0 0.0
    %1685 = vmatprep.subr.mxu0 0.0
    %1686 = vmatpush1.msra.mxu0 0.0
    %1687 = vmatprep.subr.mxu0 0.0
    %1688 = vmatpush1.msra.mxu0 0.0
    %1689 = vmatprep.subr.mxu0 0.0
    %1690 = vmatpush1.msra.mxu0 0.0
    %1691 = vmatprep.subr.mxu0 0.0
    %1692 = vmatpush1.msra.mxu0 0.0
    %1693 = vmatprep.subr.mxu0 0.0
    %1694 = vmatpush1.msra.mxu0 0.0
    %1695 = vmatprep.subr.mxu0 0.0
    %1696 = vmatpush1.msra.mxu0 0.0
    %1697 = vmatprep.subr.mxu0 0.0
    %1698 = vmatpush1.msra.mxu0 0.0
    %1699 = vmatprep.subr.mxu0 0.0
    %1700 = vmatpush1.msra.mxu0 0.0
    %1701 = vmatprep.subr.mxu0 0.0
    %1702 = vmatpush1.msra.mxu0 %v1064
    %1703 = vmatprep.subr.mxu0 0.0
    %1704 = vmatpush1.msra.mxu0 %v1063
    %1705 = vmatprep.subr.mxu0 0.0
    %1706 = vmatpush1.msra.mxu0 %v1062
    %1707 = vmatprep.subr.mxu0 0.0
    %1708 = vmatpush1.msra.mxu0 %v1061
    %1709 = vmatprep.subr.mxu0 0.0
    %1710 = vmatpush2.msra.mxu0 0.0
    %1711 = vmatprep.subr.mxu0 0.0
    %1712 = vmatpush2.msra.mxu0 0.0
    %1713 = vmatprep.subr.mxu0 0.0
    %1714 = vmatpush2.msra.mxu0 0.0
    %1715 = vmatprep.subr.mxu0 0.0
    %1716 = vmatpush2.msra.mxu0 0.0
    %1717 = vmatprep.subr.mxu0 0.0
    %1718 = vmatpush2.msra.mxu0 0.0
    %1719 = vmatprep.subr.mxu0 0.0
    %1720 = vmatpush2.msra.mxu0 0.0
    %1721 = vmatprep.subr.mxu0 0.0
    %1722 = vmatpush2.msra.mxu0 0.0
    %1723 = vmatprep.subr.mxu0 0.0
    %1724 = vmatpush2.msra.mxu0 0.0
    %1725 = vmatprep.subr.mxu0 0.0
    %1726 = vmatpush2.msra.mxu0 0.0
    %1727 = vmatprep.subr.mxu0 0.0
    %1728 = vmatpush2.msra.mxu0 0.0
    %1729 = vmatprep.subr.mxu0 0.0
    %1730 = vmatpush2.msra.mxu0 0.0
    %1731 = vmatprep.subr.mxu0 0.0
    %1732 = vmatpush2.msra.mxu0 0.0
    %1733 = vmatprep.subr.mxu0 0.0
    %1734 = vmatpush2.msra.mxu0 0.0
    %1735 = vmatprep.subr.mxu0 0.0
    %1736 = vmatpush2.msra.mxu0 0.0
    %1737 = vmatprep.subr.mxu0 0.0
    %1738 = vmatpush2.msra.mxu0 0.0
    %1739 = vmatprep.subr.mxu0 0.0
    %1740 = vmatpush2.msra.mxu0 0.0
    %1741 = vmatprep.mubr.f32.mxu0 0.0
    %1742 = vmatmul.mubr.f32.gmra.mxu0 %v1675
    %v1743 = vpop.f32.mrf.mxu0
    %v1744 = vadd.f32 0.0, %v1743
    %v1745 = vpop.f32.mrf.mxu0
    %1746 = vdwg.mxu0
    %v1748 = vrot.slane %v1744, 6
    %v1750 = vadd.f32 %v1150, %v1748
    %v1751 = vxor.u32 %v1750, 2147483648
    %v1752 = vmul.f32 %v1751, 1.442695
    %v1753 = vpow.pop %v1752
    %v1754 = vadd.f32 %v1753, 1.0
    %v1755 = vrcp.pop %v1754
    %v1756 = vmul.f32 1.0, %v1755
    %v1757 = vtanh.pop %v1750
    %v1759 = vrot.slane %v1665, 6
    %v1761 = vmul.f32 %v1756, %v1759
    %1763 = vrot.lane.b32.xlu0 %v1757, 64
    %v1764 = vpop.permute.xlu0 %1763
    %v1766 = vmul.f32 %v1756, %v1764
    %1768 = vrot.lane.b32.xlu0 %v1766, 32
    %v1769 = vpop.permute.xlu0 %1768
    %v1771 = vadd.f32 %v1761, %v1769
    %v1772 = vtanh.pop %v1771
    %1774 = vrot.lane.b32.xlu0 %v1772, 64
    %v1775 = vpop.permute.xlu0 %1774
    %v1777 = vmul.f32 %v1756, %v1775
    %v1779 = vrot.slane %v1777, 2
    %1780 = vrot.lane.b32.xlu0 %v1779, 32
    %v1781 = vpop.permute.xlu0 %1780
    %v1782 = vsel %vm179, %v1781, 0
    %1784 = vmatprep.subr.mxu0 0.0
    %1785 = vmatpush1.msra.mxu0 0.0
    %1786 = vmatprep.subr.mxu0 0.0
    %1787 = vmatpush1.msra.mxu0 0.0
    %1788 = vmatprep.subr.mxu0 0.0
    %1789 = vmatpush1.msra.mxu0 0.0
    %1790 = vmatprep.subr.mxu0 0.0
    %1791 = vmatpush1.msra.mxu0 0.0
    %1792 = vmatprep.subr.mxu0 0.0
    %1793 = vmatpush1.msra.mxu0 0.0
    %1794 = vmatprep.subr.mxu0 0.0
    %1795 = vmatpush1.msra.mxu0 0.0
    %1796 = vmatprep.subr.mxu0 0.0
    %1797 = vmatpush1.msra.mxu0 0.0
    %1798 = vmatprep.subr.mxu0 0.0
    %1799 = vmatpush1.msra.mxu0 0.0
    %1800 = vmatprep.subr.mxu0 0.0
    %1801 = vmatpush1.msra.mxu0 0.0
    %1802 = vmatprep.subr.mxu0 0.0
    %1803 = vmatpush1.msra.mxu0 0.0
    %1804 = vmatprep.subr.mxu0 0.0
    %1805 = vmatpush1.msra.mxu0 0.0
    %1806 = vmatprep.subr.mxu0 0.0
    %1807 = vmatpush1.msra.mxu0 0.0
    %1808 = vmatprep.subr.mxu0 0.0
    %1809 = vmatpush1.msra.mxu0 %v1064
    %1810 = vmatprep.subr.mxu0 0.0
    %1811 = vmatpush1.msra.mxu0 %v1063
    %1812 = vmatprep.subr.mxu0 0.0
    %1813 = vmatpush1.msra.mxu0 %v1062
    %1814 = vmatprep.subr.mxu0 0.0
    %1815 = vmatpush1.msra.mxu0 %v1061
    %1816 = vmatprep.subr.mxu0 0.0
    %1817 = vmatpush2.msra.mxu0 0.0
    %1818 = vmatprep.subr.mxu0 0.0
    %1819 = vmatpush2.msra.mxu0 0.0
    %1820 = vmatprep.subr.mxu0 0.0
    %1821 = vmatpush2.msra.mxu0 0.0
    %1822 = vmatprep.subr.mxu0 0.0
    %1823 = vmatpush2.msra.mxu0 0.0
    %1824 = vmatprep.subr.mxu0 0.0
    %1825 = vmatpush2.msra.mxu0 0.0
    %1826 = vmatprep.subr.mxu0 0.0
    %1827 = vmatpush2.msra.mxu0 0.0
    %1828 = vmatprep.subr.mxu0 0.0
    %1829 = vmatpush2.msra.mxu0 0.0
    %1830 = vmatprep.subr.mxu0 0.0
    %1831 = vmatpush2.msra.mxu0 0.0
    %1832 = vmatprep.subr.mxu0 0.0
    %1833 = vmatpush2.msra.mxu0 0.0
    %1834 = vmatprep.subr.mxu0 0.0
    %1835 = vmatpush2.msra.mxu0 0.0
    %1836 = vmatprep.subr.mxu0 0.0
    %1837 = vmatpush2.msra.mxu0 0.0
    %1838 = vmatprep.subr.mxu0 0.0
    %1839 = vmatpush2.msra.mxu0 0.0
    %1840 = vmatprep.subr.mxu0 0.0
    %1841 = vmatpush2.msra.mxu0 0.0
    %1842 = vmatprep.subr.mxu0 0.0
    %1843 = vmatpush2.msra.mxu0 0.0
    %1844 = vmatprep.subr.mxu0 0.0
    %1845 = vmatpush2.msra.mxu0 0.0
    %1846 = vmatprep.subr.mxu0 0.0
    %1847 = vmatpush2.msra.mxu0 0.0
    %1848 = vmatprep.mubr.f32.mxu0 0.0
    %1849 = vmatmul.mubr.f32.gmra.mxu0 %v1782
    %v1850 = vpop.f32.mrf.mxu0
    %v1851 = vadd.f32 0.0, %v1850
    %v1852 = vpop.f32.mrf.mxu0
    %1853 = vdwg.mxu0
    %v1855 = vrot.slane %v1851, 4
    %v1857 = vadd.f32 %v1150, %v1855
    %v1858 = vxor.u32 %v1857, 2147483648
    %v1859 = vmul.f32 %v1858, 1.442695
    %v1860 = vpow.pop %v1859
    %v1861 = vadd.f32 %v1860, 1.0
    %v1862 = vrcp.pop %v1861
    %v1863 = vmul.f32 1.0, %v1862
    %v1864 = vtanh.pop %v1857
    %v1866 = vrot.slane %v1771, 6
    %v1868 = vmul.f32 %v1863, %v1866
    %1870 = vrot.lane.b32.xlu0 %v1864, 64
    %v1871 = vpop.permute.xlu0 %1870
    %v1873 = vmul.f32 %v1863, %v1871
    %1875 = vrot.lane.b32.xlu0 %v1873, 32
    %v1876 = vpop.permute.xlu0 %1875
    %v1878 = vadd.f32 %v1868, %v1876
    %v1879 = vtanh.pop %v1878
    %1881 = vrot.lane.b32.xlu0 %v1879, 64
    %v1882 = vpop.permute.xlu0 %1881
    %v1884 = vmul.f32 %v1863, %v1882
    %v1886 = vrot.slane %v1884, 4
    %1887 = vrot.lane.b32.xlu0 %v1886, 32
    %v1888 = vpop.permute.xlu0 %1887
    %v1889 = vsel %vm179, %v1888, 0
    %1891 = vmatprep.subr.mxu0 0.0
    %1892 = vmatpush1.msra.mxu0 0.0
    %1893 = vmatprep.subr.mxu0 0.0
    %1894 = vmatpush1.msra.mxu0 0.0
    %1895 = vmatprep.subr.mxu0 0.0
    %1896 = vmatpush1.msra.mxu0 0.0
    %1897 = vmatprep.subr.mxu0 0.0
    %1898 = vmatpush1.msra.mxu0 0.0
    %1899 = vmatprep.subr.mxu0 0.0
    %1900 = vmatpush1.msra.mxu0 0.0
    %1901 = vmatprep.subr.mxu0 0.0
    %1902 = vmatpush1.msra.mxu0 0.0
    %1903 = vmatprep.subr.mxu0 0.0
    %1904 = vmatpush1.msra.mxu0 0.0
    %1905 = vmatprep.subr.mxu0 0.0
    %1906 = vmatpush1.msra.mxu0 0.0
    %1907 = vmatprep.subr.mxu0 0.0
    %1908 = vmatpush1.msra.mxu0 0.0
    %1909 = vmatprep.subr.mxu0 0.0
    %1910 = vmatpush1.msra.mxu0 0.0
    %1911 = vmatprep.subr.mxu0 0.0
    %1912 = vmatpush1.msra.mxu0 0.0
    %1913 = vmatprep.subr.mxu0 0.0
    %1914 = vmatpush1.msra.mxu0 0.0
    %1915 = vmatprep.subr.mxu0 0.0
    %1916 = vmatpush1.msra.mxu0 %v1064
    %1917 = vmatprep.subr.mxu0 0.0
    %1918 = vmatpush1.msra.mxu0 %v1063
    %1919 = vmatprep.subr.mxu0 0.0
    %1920 = vmatpush1.msra.mxu0 %v1062
    %1921 = vmatprep.subr.mxu0 0.0
    %1922 = vmatpush1.msra.mxu0 %v1061
    %1923 = vmatprep.subr.mxu0 0.0
    %1924 = vmatpush2.msra.mxu0 0.0
    %1925 = vmatprep.subr.mxu0 0.0
    %1926 = vmatpush2.msra.mxu0 0.0
    %1927 = vmatprep.subr.mxu0 0.0
    %1928 = vmatpush2.msra.mxu0 0.0
    %1929 = vmatprep.subr.mxu0 0.0
    %1930 = vmatpush2.msra.mxu0 0.0
    %1931 = vmatprep.subr.mxu0 0.0
    %1932 = vmatpush2.msra.mxu0 0.0
    %1933 = vmatprep.subr.mxu0 0.0
    %1934 = vmatpush2.msra.mxu0 0.0
    %1935 = vmatprep.subr.mxu0 0.0
    %1936 = vmatpush2.msra.mxu0 0.0
    %1937 = vmatprep.subr.mxu0 0.0
    %1938 = vmatpush2.msra.mxu0 0.0
    %1939 = vmatprep.subr.mxu0 0.0
    %1940 = vmatpush2.msra.mxu0 0.0
    %1941 = vmatprep.subr.mxu0 0.0
    %1942 = vmatpush2.msra.mxu0 0.0
    %1943 = vmatprep.subr.mxu0 0.0
    %1944 = vmatpush2.msra.mxu0 0.0
    %1945 = vmatprep.subr.mxu0 0.0
    %1946 = vmatpush2.msra.mxu0 0.0
    %1947 = vmatprep.subr.mxu0 0.0
    %1948 = vmatpush2.msra.mxu0 0.0
    %1949 = vmatprep.subr.mxu0 0.0
    %1950 = vmatpush2.msra.mxu0 0.0
    %1951 = vmatprep.subr.mxu0 0.0
    %1952 = vmatpush2.msra.mxu0 0.0
    %1953 = vmatprep.subr.mxu0 0.0
    %1954 = vmatpush2.msra.mxu0 0.0
    %1955 = vmatprep.mubr.f32.mxu0 0.0
    %1956 = vmatmul.mubr.f32.gmra.mxu0 %v1889
    %v1957 = vpop.f32.mrf.mxu0
    %v1958 = vadd.f32 0.0, %v1957
    %v1959 = vpop.f32.mrf.mxu0
    %1960 = vdwg.mxu0
    %v1962 = vrot.slane %v1958, 2
    %v1964 = vadd.f32 %v1150, %v1962
    %v1965 = vxor.u32 %v1964, 2147483648
    %v1966 = vmul.f32 %v1965, 1.442695
    %v1967 = vpow.pop %v1966
    %v1968 = vadd.f32 %v1967, 1.0
    %v1969 = vrcp.pop %v1968
    %v1970 = vmul.f32 1.0, %v1969
    %v1971 = vtanh.pop %v1964
    %v1973 = vrot.slane %v1878, 6
    %v1975 = vmul.f32 %v1970, %v1973
    %1977 = vrot.lane.b32.xlu0 %v1971, 64
    %v1978 = vpop.permute.xlu0 %1977
    %v1980 = vmul.f32 %v1970, %v1978
    %1982 = vrot.lane.b32.xlu0 %v1980, 32
    %v1983 = vpop.permute.xlu0 %1982
    %v1985 = vadd.f32 %v1975, %v1983
    %v1986 = vtanh.pop %v1985
    %1988 = vrot.lane.b32.xlu0 %v1986, 64
    %v1989 = vpop.permute.xlu0 %1988
    %v1991 = vmul.f32 %v1970, %v1989
    %v1992 = vld [vmem:[%s7] sm:$0xff]
    %v1993 = vld [vmem:[%s7 + $0x8] sm:$0xff]
    %v1994 = vld [vmem:[%s7 + $0x10] sm:$0xff]
    %v1995 = vld [vmem:[%s7 + $0x18] sm:$0xff]
    %v1996 = vld [vmem:[#allocation9] sm:$0x1]
    %v1998 = vlaneseq
    %v1999 = vshrl.u32 %v1998, 7
    %v2000 = vsub.s32 0, %v1999
    %v2001 = vrot.slane %v1996, %v2000
    %v2004 = vrot.slane %v1991, 6
    %2005 = vrot.lane.b32.xlu0 %v2004, 32
    %v2006 = vpop.permute.xlu0 %2005
    %v2007 = vsel %vm179, %v2006, 0
    %2009 = vmatprep.subr.mxu0 0.0
    %2010 = vmatpush1.msra.mxu0 0.0
    %2011 = vmatprep.subr.mxu0 0.0
    %2012 = vmatpush1.msra.mxu0 0.0
    %2013 = vmatprep.subr.mxu0 0.0
    %2014 = vmatpush1.msra.mxu0 0.0
    %2015 = vmatprep.subr.mxu0 0.0
    %2016 = vmatpush1.msra.mxu0 0.0
    %2017 = vmatprep.subr.mxu0 0.0
    %2018 = vmatpush1.msra.mxu0 0.0
    %2019 = vmatprep.subr.mxu0 0.0
    %2020 = vmatpush1.msra.mxu0 0.0
    %2021 = vmatprep.subr.mxu0 0.0
    %2022 = vmatpush1.msra.mxu0 0.0
    %2023 = vmatprep.subr.mxu0 0.0
    %2024 = vmatpush1.msra.mxu0 0.0
    %2025 = vmatprep.subr.mxu0 0.0
    %2026 = vmatpush1.msra.mxu0 0.0
    %2027 = vmatprep.subr.mxu0 0.0
    %2028 = vmatpush1.msra.mxu0 0.0
    %2029 = vmatprep.subr.mxu0 0.0
    %2030 = vmatpush1.msra.mxu0 0.0
    %2031 = vmatprep.subr.mxu0 0.0
    %2032 = vmatpush1.msra.mxu0 0.0
    %2033 = vmatprep.subr.mxu0 0.0
    %2034 = vmatpush1.msra.mxu0 %v1995
    %2035 = vmatprep.subr.mxu0 0.0
    %2036 = vmatpush1.msra.mxu0 %v1994
    %2037 = vmatprep.subr.mxu0 0.0
    %2038 = vmatpush1.msra.mxu0 %v1993
    %2039 = vmatprep.subr.mxu0 0.0
    %2040 = vmatpush1.msra.mxu0 %v1992
    %2041 = vmatprep.subr.mxu0 0.0
    %2042 = vmatpush2.msra.mxu0 0.0
    %2043 = vmatprep.subr.mxu0 0.0
    %2044 = vmatpush2.msra.mxu0 0.0
    %2045 = vmatprep.subr.mxu0 0.0
    %2046 = vmatpush2.msra.mxu0 0.0
    %2047 = vmatprep.subr.mxu0 0.0
    %2048 = vmatpush2.msra.mxu0 0.0
    %2049 = vmatprep.subr.mxu0 0.0
    %2050 = vmatpush2.msra.mxu0 0.0
    %2051 = vmatprep.subr.mxu0 0.0
    %2052 = vmatpush2.msra.mxu0 0.0
    %2053 = vmatprep.subr.mxu0 0.0
    %2054 = vmatpush2.msra.mxu0 0.0
    %2055 = vmatprep.subr.mxu0 0.0
    %2056 = vmatpush2.msra.mxu0 0.0
    %2057 = vmatprep.subr.mxu0 0.0
    %2058 = vmatpush2.msra.mxu0 0.0
    %2059 = vmatprep.subr.mxu0 0.0
    %2060 = vmatpush2.msra.mxu0 0.0
    %2061 = vmatprep.subr.mxu0 0.0
    %2062 = vmatpush2.msra.mxu0 0.0
    %2063 = vmatprep.subr.mxu0 0.0
    %2064 = vmatpush2.msra.mxu0 0.0
    %2065 = vmatprep.subr.mxu0 0.0
    %2066 = vmatpush2.msra.mxu0 0.0
    %2067 = vmatprep.subr.mxu0 0.0
    %2068 = vmatpush2.msra.mxu0 0.0
    %2069 = vmatprep.subr.mxu0 0.0
    %2070 = vmatpush2.msra.mxu0 0.0
    %2071 = vmatprep.subr.mxu0 0.0
    %2072 = vmatpush2.msra.mxu0 0.0
    %2073 = vmatprep.mubr.f32.mxu0 0.0
    %2074 = vmatmul.mubr.f32.gmra.mxu0 %v2007
    %v2075 = vpop.f32.mrf.mxu0
    %v2076 = vadd.f32 %v2001, %v2075
    %v2077 = vpop.f32.mrf.mxu0
    %2078 = vdwg.mxu0
    %vm2079 = vcmask 74752
    %2080 = vst.msk [vmem:[#allocation11] sm:$0x3] %vm2079, %v2076
    // Predicated region
    $region54: #{_rnn_forward_impl.1} parent=1 // pred_check
      _
    $region55: #{_rnn_forward_impl.1} parent=1 // pred_check_branch
      %2082 = sbr.rel (0) target = $region57
    $region56: #{_rnn_forward_impl.1} parent=1 // pred_region
      %s2084 = ssub.s32 32, 32
      %2085 = vsyncadd [#allocation5], %s2084
      %s2087 = sshll.u32 [#allocation11], 4
      %s2088 = int_to_ptr.vmem [resolvable:$true] %s2087
      %2090 = dma.vmem_to_hbm [thread:$0]  %s2088, 32, %s9, [#allocation5]
    $region57: #{_rnn_forward_impl.1} parent=1 // pred_fallthru
      _
    // Predicated region
    $region58: #{_rnn_forward_impl.1} parent=1 // pred_check
      _
    $region59: #{_rnn_forward_impl.1} parent=1 // pred_check_branch
      %2092 = sbr.rel (0) target = $region61
    $region60: #{_rnn_forward_impl.1} parent=1 // pred_region
      %2093 = dma.done [#allocation5], 32
    $region61: #{_rnn_forward_impl.1} parent=1 // pred_fallthru
      _
    %2094 = vsyncpa [#allocation4], 1
    %2095 = vsyncpa [#allocation7], 1
    %2096 = vsyncpa [#allocation10], 1
    %2097 = vsyncpa [#allocation5], 1

</llo_original>
